<compile_context>
chip_gen: v6e
topology: v6e:2x2x1
jax: 0.10.0
libtpu: 0.0.40
codegen_flags: <defaults>
</compile_context>

<pallas_src>
import functools
import math

import jax
import jax.numpy as jnp
from jax.experimental import pallas as pl
from jax.experimental.pallas import tpu as pltpu


def _encoder_kernel(patches_ref, w_ref, b_ref, t_ref, out_ref, acc_ref):
    # patches_ref: (NC, TB, K) bf16 -- NC patch rows for each of TB batch elems
    # w_ref:       (K, TD)     bf16 -- 2 * W^T  (factor 2 from product-to-sum)
    # b_ref:       (1, TD)     f32  -- Sinusoid bias
    # t_ref:       (1, TD)     f32  -- threshold NPp * sin(bias)
    # out_ref:     (TB, TD)    f32  -- hard-quantized multiset hypervectors
    # acc_ref:     (TB, TD)    f32  -- VMEM accumulator, persists across n steps
    n = pl.program_id(2)

    @pl.when(n == 0)
    def _():
        acc_ref[...] = jnp.zeros_like(acc_ref)

    nc, tb, k = patches_ref.shape
    td = w_ref.shape[1]

    # One MXU push per chunk: (NC*TB, K) x (K, TD), f32 accumulate.
    p = jnp.dot(patches_ref[...].reshape(nc * tb, k), w_ref[...],
                preferred_element_type=jnp.float32)            # = 2*proj (f32)
    s = jnp.sin(p + b_ref[...])                                # 1 EUP op / element
    # Sum over the leading (chunk) axis: NC elementwise (TB, TD) adds (VPU only).
    acc_ref[...] += jnp.sum(s.reshape(nc, tb, td), axis=0)

    @pl.when(n == pl.num_programs(2) - 1)
    def _():
        # multiset sum = 0.5*(acc - NPp*sin(b)); hard_quantize: > 0 -> +1 else -1
        out_ref[...] = jnp.where(acc_ref[...] > t_ref[...], 1.0, -1.0
                                 ).astype(out_ref.dtype)


def extract_patches(x, patch_size):
    """NCHW -> (B, C*n_patches, P*P), matching x.unfold(2,P,P).unfold(3,P,P)."""
    B, C, H, W = x.shape
    P = patch_size
    hp, wp = H // P, W // P
    x = x.reshape(B, C, hp, P, wp, P)
    x = jnp.transpose(x, (0, 1, 2, 4, 3, 5))      # (B, C, hp, wp, P, P)
    return x.reshape(B, C * hp * wp, P * P)


def _round_up(a, b):
    return (a + b - 1) // b * b


@functools.partial(jax.jit, static_argnames=("patch_size",))
def encoder_forward(x, weight, bias, patch_size):
    """x: (B, C, H, W); weight: (D, P*P); bias: (1, D). Returns (B, D) f32."""
    B = x.shape[0]
    D, K = weight.shape

    patches = extract_patches(x.astype(jnp.float32), patch_size)  # (B, NP, K)
    NP = patches.shape[1]

    TB = 8                                    # full-sublane batch tile
    Bp = _round_up(B, TB)
    NC = 16                                   # patches per reduction step (M=128)
    NPp = _round_up(NP, NC)
    TD = min(_round_up(D, 128), 512)          # lane-dense hypervector tile
    Dp = _round_up(D, TD)

    # Zero-pad batch and patch count.  Zero patches contribute exactly sin(bias)
    # each, which the NPp*sin(bias) threshold absorbs; padded batch rows give
    # acc == thresh -> -1 and are sliced off below.
    patches = jnp.pad(patches, ((0, Bp - B), (0, NPp - NP), (0, 0)))
    # Layout (NPp, Bp, K): reduction chunks on the leading axis, batch on the
    # 8-dense sublane axis.  bf16 for the MXU.
    patches_nbk = jnp.transpose(patches, (1, 0, 2)).astype(jnp.bfloat16)

    # Product-to-sum:  cos(p + b) * sin(p) = 0.5 * (sin(2p + b) - sin(b)).
    # Fold the 2 into the pre-transposed weight; precompute t = NPp * sin(b).
    w_t = (2.0 * jnp.transpose(weight)).astype(jnp.bfloat16)       # (K, D)
    bias2 = bias.astype(jnp.float32).reshape(1, D)
    if Dp != D:
        w_t = jnp.pad(w_t, ((0, 0), (0, Dp - D)))
        bias2 = jnp.pad(bias2, ((0, 0), (0, Dp - D)))
    thresh = float(NPp) * jnp.sin(bias2)                            # (1, Dp)

    out = pl.pallas_call(
        _encoder_kernel,
        out_shape=jax.ShapeDtypeStruct((Bp, Dp), jnp.float32),
        grid_spec=pltpu.PrefetchScalarGridSpec(
            num_scalar_prefetch=0,
            grid=(Bp // TB, Dp // TD, NPp // NC),
            in_specs=[
                pl.BlockSpec((NC, TB, K), lambda b, d, n: (n, b, 0)),
                pl.BlockSpec((K, TD), lambda b, d, n: (0, d)),
                pl.BlockSpec((1, TD), lambda b, d, n: (0, d)),
                pl.BlockSpec((1, TD), lambda b, d, n: (0, d)),
            ],
            out_specs=pl.BlockSpec((TB, TD), lambda b, d, n: (b, d)),
            scratch_shapes=[pltpu.VMEM((TB, TD), jnp.float32)],
        ),
        compiler_params=pltpu.CompilerParams(
            dimension_semantics=("parallel", "parallel", "arbitrary")),
    )(patches_nbk, w_t, bias2, thresh)

    return out[:B, :D]


if __name__ == "__main__":
    # Small shapes consistent with the module's forward.
    B, C, H, W = 2, 4, 16, 16
    patch_size = 4
    out_features = 32          # hypervector dimensionality D
    K = patch_size * patch_size

    key = jax.random.PRNGKey(0)
    kx, kw, kb = jax.random.split(key, 3)

    x = jax.random.normal(kx, (B, C, H, W), dtype=jnp.float32)

    # Deterministic Sinusoid embedding params (torchhd.embeddings.Sinusoid):
    #   weight ~ N(0, 1), shape (out_features, in_features)
    #   bias   ~ U[0, 2*pi), shape (1, out_features)
    weight = jax.random.normal(kw, (out_features, K), dtype=jnp.float32)
    bias = jax.random.uniform(kb, (1, out_features), dtype=jnp.float32,
                              minval=0.0, maxval=2.0 * math.pi)

    out = encoder_forward(x, weight, bias, patch_size)
    out = jax.block_until_ready(out)

    # Pure-JAX f32 reference (original formula).  The identity rewrite plus the
    # bf16 matmul inputs can only flip the sign when the multiset sum is close
    # to zero, so only compare where |sum| is well away from 0.
    patches = extract_patches(x, patch_size)                        # (B, NP, K)
    proj = jnp.einsum("bnk,dk->bnd", patches, weight)
    hv = jnp.cos(proj + bias[None]) * jnp.sin(proj)
    ref_sum = jnp.sum(hv, axis=1)                                   # (B, D)
    ref = jnp.where(ref_sum > 0.0, 1.0, -1.0)
    decided = jnp.abs(ref_sum) > 0.3

    assert out.shape == (B, out_features)
    assert bool(jnp.all(jnp.abs(out) == 1.0))
    assert bool(jnp.all(jnp.where(decided, out == ref, True)))

    print("KERNEL_OK")
</pallas_src>

<mosaic_0001>
module attributes {stable_mosaic.version = 11 : i64} {
  func.func @_encoder_kernel(%arg0: i32, %arg1: i32, %arg2: i32, %arg3: memref<16x8x16xbf16, #tpu.memory_space<vmem>>, %arg4: memref<16x128xbf16, #tpu.memory_space<vmem>>, %arg5: memref<1x128xf32, #tpu.memory_space<vmem>>, %arg6: memref<1x128xf32, #tpu.memory_space<vmem>>, %arg7: memref<8x128xf32, #tpu.memory_space<vmem>>, %arg8: memref<8x128xf32, #tpu.memory_space<vmem>>) attributes {dimension_semantics = [#tpu.dimension_semantics<parallel>, #tpu.dimension_semantics<parallel>, #tpu.dimension_semantics<arbitrary>], iteration_bounds = array<i64: 1, 1, 4>, scalar_prefetch = 0 : i64, scratch_operands = 1 : i64, tpu.core_type = #tpu.core_type<tc>, window_params = [{transform_indices = @transform_0, window_bounds = array<i64: 16, 8, 16>}, {transform_indices = @transform_1, window_bounds = array<i64: 16, 128>}, {transform_indices = @transform_2, window_bounds = array<i64: 1, 128>}, {transform_indices = @transform_3, window_bounds = array<i64: 1, 128>}, {transform_indices = @transform_4, window_bounds = array<i64: 8, 128>}]} {
    %c0_i32 = arith.constant 0 : i32
    %0 = arith.cmpi eq, %arg2, %c0_i32 : i32
    %1 = arith.extui %0 : i1 to i32
    %c0_i32_0 = arith.constant 0 : i32
    %2 = arith.cmpi ne, %1, %c0_i32_0 : i32
    scf.if %2 {
      %cst_13 = arith.constant 0.000000e+00 : f32
      %19 = vector.broadcast %cst_13 : f32 to vector<8x128xf32>
      %c0_14 = arith.constant 0 : index
      %c0_15 = arith.constant 0 : index
      %20 = vector.load %arg8[%c0_14, %c0_15] : memref<8x128xf32, #tpu.memory_space<vmem>>, vector<8x128xf32>
      tpu.vector_store %arg8[%c0_14, %c0_15], %19 {strides = array<i32>} : memref<8x128xf32, #tpu.memory_space<vmem>>, vector<8x128xf32>,
    } else {
    }
    %c0 = arith.constant 0 : index
    %c0_1 = arith.constant 0 : index
    %c0_2 = arith.constant 0 : index
    %3 = vector.load %arg3[%c0, %c0_1, %c0_2] : memref<16x8x16xbf16, #tpu.memory_space<vmem>>, vector<16x8x16xbf16>
    %4 = vector.shape_cast %3 : vector<16x8x16xbf16> to vector<128x16xbf16>
    %c0_3 = arith.constant 0 : index
    %c0_4 = arith.constant 0 : index
    %5 = vector.load %arg4[%c0_3, %c0_4] : memref<16x128xbf16, #tpu.memory_space<vmem>>, vector<16x128xbf16>
    %cst = arith.constant dense<0.000000e+00> : vector<128x128xf32>
    %6 = tpu.matmul %4, %5, %cst {dimension_numbers = #tpu.dot_dimension_numbers<[1], [0], [0], [1], [0, 0, 1, 1], [], []>} : vector<128x16xbf16>, vector<16x128xbf16>, vector<128x128xf32> -> vector<128x128xf32>
    %c0_5 = arith.constant 0 : index
    %c0_6 = arith.constant 0 : index
    %7 = vector.load %arg5[%c0_5, %c0_6] : memref<1x128xf32, #tpu.memory_space<vmem>>, vector<1x128xf32>
    %8 = vector.broadcast %7 : vector<1x128xf32> to vector<128x128xf32>
    %9 = arith.addf %6, %8 : vector<128x128xf32>
    %10 = math.sin %9 : vector<128x128xf32>
    %c0_7 = arith.constant 0 : index
    %c0_8 = arith.constant 0 : index
    %11 = vector.load %arg8[%c0_7, %c0_8] : memref<8x128xf32, #tpu.memory_space<vmem>>, vector<8x128xf32>
    %12 = vector.shape_cast %10 : vector<128x128xf32> to vector<16x8x128xf32>
    %cst_9 = arith.constant dense<0.000000e+00> : vector<8x128xf32>
    %13 = vector.multi_reduction <add>, %12, %cst_9 [0] : vector<16x8x128xf32> to vector<8x128xf32>
    %14 = arith.addf %11, %13 : vector<8x128xf32>
    %c0_10 = arith.constant 0 : index
    %c0_11 = arith.constant 0 : index
    %15 = vector.load %arg8[%c0_10, %c0_11] : memref<8x128xf32, #tpu.memory_space<vmem>>, vector<8x128xf32>
    tpu.vector_store %arg8[%c0_10, %c0_11], %14 {strides = array<i32>} : memref<8x128xf32, #tpu.memory_space<vmem>>, vector<8x128xf32>,
    %c3_i32 = arith.constant 3 : i32
    %16 = arith.cmpi eq, %arg2, %c3_i32 : i32
    %17 = arith.extui %16 : i1 to i32
    %c0_i32_12 = arith.constant 0 : i32
    %18 = arith.cmpi ne, %17, %c0_i32_12 : i32
    scf.if %18 {
      %c0_13 = arith.constant 0 : index
      %c0_14 = arith.constant 0 : index
      %19 = vector.load %arg8[%c0_13, %c0_14] : memref<8x128xf32, #tpu.memory_space<vmem>>, vector<8x128xf32>
      %c0_15 = arith.constant 0 : index
      %c0_16 = arith.constant 0 : index
      %20 = vector.load %arg6[%c0_15, %c0_16] : memref<1x128xf32, #tpu.memory_space<vmem>>, vector<1x128xf32>
      %21 = vector.broadcast %20 : vector<1x128xf32> to vector<8x128xf32>
      %22 = arith.cmpf ogt, %19, %21 : vector<8x128xf32>
      %cst_17 = arith.constant 1.000000e+00 : f32
      %cst_18 = arith.constant -1.000000e+00 : f32
      %23 = vector.broadcast %cst_17 : f32 to vector<8x128xf32>
      %24 = vector.broadcast %cst_18 : f32 to vector<8x128xf32>
      %25 = arith.select %22, %23, %24 : vector<8x128xi1>, vector<8x128xf32>
      %c0_19 = arith.constant 0 : index
      %c0_20 = arith.constant 0 : index
      %26 = vector.load %arg7[%c0_19, %c0_20] : memref<8x128xf32, #tpu.memory_space<vmem>>, vector<8x128xf32>
      tpu.vector_store %arg7[%c0_19, %c0_20], %25 {strides = array<i32>} : memref<8x128xf32, #tpu.memory_space<vmem>>, vector<8x128xf32>,
    } else {
    }
    return
  }
  func.func @transform_0(%arg0: i32, %arg1: i32, %arg2: i32) -> (i32, i32, i32) {
    %c0_i32 = arith.constant 0 : i32
    %c0_i32_0 = arith.constant 0 : i32
    return %arg2, %arg0, %c0_i32 : i32, i32, i32
  }
  func.func @transform_1(%arg0: i32, %arg1: i32, %arg2: i32) -> (i32, i32) {
    %c0_i32 = arith.constant 0 : i32
    %c0_i32_0 = arith.constant 0 : i32
    return %c0_i32, %arg1 : i32, i32
  }
  func.func @transform_2(%arg0: i32, %arg1: i32, %arg2: i32) -> (i32, i32) {
    %c0_i32 = arith.constant 0 : i32
    %c0_i32_0 = arith.constant 0 : i32
    return %c0_i32, %arg1 : i32, i32
  }
  func.func @transform_3(%arg0: i32, %arg1: i32, %arg2: i32) -> (i32, i32) {
    %c0_i32 = arith.constant 0 : i32
    %c0_i32_0 = arith.constant 0 : i32
    return %c0_i32, %arg1 : i32, i32
  }
  func.func @transform_4(%arg0: i32, %arg1: i32, %arg2: i32) -> (i32, i32) {
    %c0_i32 = arith.constant 0 : i32
    return %arg0, %arg1 : i32, i32
  }
}

</mosaic_0001>

<llo_original>
// kernel: encoder_forward.1
$region0: #{encoder_forward.1}
  #allocation0 [shape = 'u32[]', space=smem, size = 0x4, offset = 0x4, fixed_abs, tag = 'smem constant byte address 0x4 - core index']
  #allocation1 [shape = 'u32[144,128]{1,0:T(1,128)}', space=vmem, size = 0x12000, scoped, tag = 'internal scratch']
  #allocation2 [shape = 'f32[8,128]{1,0:T(8,128)}', space=vmem, size = 0x1000, scoped, tag = 'scratch operand']
  %s0 = inlined_call_operand.vmem [shape: bf16[64,8,16], index: 0, kind: input, shape index: {}]
  %s1 = inlined_call_operand.vmem [shape: bf16[16,128], index: 1, kind: input, shape index: {}]
  %s2 = inlined_call_operand.vmem [shape: f32[1,128], index: 2, kind: input, shape index: {}]
  %s3 = inlined_call_operand.vmem [shape: f32[1,128], index: 3, kind: input, shape index: {}]
  %s4 = inlined_call_operand.vmem [shape: f32[8,128], index: 4, kind: output, shape index: {}]
  %s5 = sld [smem:[#allocation0]]
  $region57: #{encoder_forward.1} parent=0
    _
  %s7 = ssub.s32 1, %s5
  %s8 = scalar_select 0, %s7, %s5
  loop: start=0, step=1, limit=6
  $region2: #{encoder_forward.1} parent=0 // loop_pre_header
    _
  $region3: #{encoder_forward.1} parent=0 // loop_header
    %s10 = sphi 0, %s14
    %p11 = scmp.ge.s32.totalorder %s10, 6
    %s17 = sphi 0, %s36
    %s18 = sphi 0, %s32
    %s19 = sphi 0, %s28
    %s20 = sphi 0, %s17
    %s21 = sphi 0, %s18
    %s22 = sphi 0, %s19
    %s23 = sphi 0, %s20
    %s24 = sphi 0, %s21
    %s25 = sphi 0, %s22
    %s41 = sphi 0, %s43
    %s44 = sphi 0, %s41
    %s45 = sphi 0, %s44
    %s61 = sphi 0, %s45
    %s67 = sphi 0, %s69
    %s70 = sphi 0, %s67
    %s71 = sphi 0, %s70
    %s87 = sphi 0, %s71
    %s93 = sphi 0, %s95
    %s96 = sphi 0, %s93
    %s97 = sphi 0, %s96
    %s113 = sphi 0, %s97
    %s119 = sphi 0, %s121
    %s122 = sphi 0, %s119
    %s123 = sphi 0, %s122
    %s139 = sphi 0, %s123
    %s147 = sphi 0, %s149
    %s150 = sphi 0, %s147
    %s151 = sphi 0, %s150
    %s167 = sphi 0, %s151
  $region4: #{encoder_forward.1} parent=0 // loop_header_branch
    %13 = sbr.rel (%p11) target = $region8
  $region5: #{encoder_forward.1} parent=0 // loop_body
    %s15 = ssub.s32 %s10, 1
    %s16 = ssub.s32 %s10, 2
    %s26 = sadd.s32 1, %s19
    %p27 = scmp.ge.s32.totalorder %s26, 4
    %s28 = scalar_select %p27, 0, %s26
    %s29 = sadd.s32 1, %s18
    %s30 = scalar_select %p27, %s29, %s18
    %p31 = scmp.ge.s32.totalorder %s30, 1
    %s32 = scalar_select %p31, 0, %s30
    %s33 = sadd.s32 1, %s17
    %s34 = scalar_select %p31, %s33, %s17
    %p35 = scmp.ge.s32.totalorder %s34, 1
    %s36 = scalar_select %p35, 0, %s34
    %s37 = ssub.s32 %s19, %s28
    %s38 = ssub.s32 %s17, %s36
    %s39 = sor.u32 %s37, %s38
    %p40 = scmp.eq.s32.totalorder %s39, 0
    %s42 = sadd.s32 %s41, 1
    %s43 = scalar_select %p40, %s41, %s42
    %p46 = pneg %p40
    %p47 = scmp.eq.s32.totalorder %s10, 3
    %p48 = por %p46, %p47
    %p49 = scmp.ne.s32.totalorder %s41, %s44
    %p50 = scmp.eq.s32.totalorder %s10, 0
    %p51 = por %p49, %p50
    %p52 = scmp.ne.s32.totalorder %s41, %s44
    %p53 = scmp.eq.s32.totalorder %s15, 3
    %p54 = por %p52, %p53
    %p55 = scmp.ne.s32.totalorder %s44, %s45
    %p56 = scmp.eq.s32.totalorder %s15, 0
    %p57 = por %p55, %p56
    %p58 = scmp.ne.s32.totalorder %s44, %s45
    %p59 = scmp.eq.s32.totalorder %s16, 3
    %p60 = por %p58, %p59
    %p62 = scmp.ne.s32.totalorder %s45, %s61
    %p63 = scmp.eq.s32.totalorder %s16, 0
    %p64 = por %p62, %p63
    %s65 = ssub.s32 %s18, %s32
    %p66 = scmp.eq.s32.totalorder %s65, 0
    %s68 = sadd.s32 %s67, 1
    %s69 = scalar_select %p66, %s67, %s68
    %p72 = pneg %p66
    %p73 = scmp.eq.s32.totalorder %s10, 3
    %p74 = por %p72, %p73
    %p75 = scmp.ne.s32.totalorder %s67, %s70
    %p76 = scmp.eq.s32.totalorder %s10, 0
    %p77 = por %p75, %p76
    %p78 = scmp.ne.s32.totalorder %s67, %s70
    %p79 = scmp.eq.s32.totalorder %s15, 3
    %p80 = por %p78, %p79
    %p81 = scmp.ne.s32.totalorder %s70, %s71
    %p82 = scmp.eq.s32.totalorder %s15, 0
    %p83 = por %p81, %p82
    %p84 = scmp.ne.s32.totalorder %s70, %s71
    %p85 = scmp.eq.s32.totalorder %s16, 3
    %p86 = por %p84, %p85
    %p88 = scmp.ne.s32.totalorder %s71, %s87
    %p89 = scmp.eq.s32.totalorder %s16, 0
    %p90 = por %p88, %p89
    %s91 = ssub.s32 %s18, %s32
    %p92 = scmp.eq.s32.totalorder %s91, 0
    %s94 = sadd.s32 %s93, 1
    %s95 = scalar_select %p92, %s93, %s94
    %p98 = pneg %p92
    %p99 = scmp.eq.s32.totalorder %s10, 3
    %p100 = por %p98, %p99
    %p101 = scmp.ne.s32.totalorder %s93, %s96
    %p102 = scmp.eq.s32.totalorder %s10, 0
    %p103 = por %p101, %p102
    %p104 = scmp.ne.s32.totalorder %s93, %s96
    %p105 = scmp.eq.s32.totalorder %s15, 3
    %p106 = por %p104, %p105
    %p107 = scmp.ne.s32.totalorder %s96, %s97
    %p108 = scmp.eq.s32.totalorder %s15, 0
    %p109 = por %p107, %p108
    %p110 = scmp.ne.s32.totalorder %s96, %s97
    %p111 = scmp.eq.s32.totalorder %s16, 3
    %p112 = por %p110, %p111
    %p114 = scmp.ne.s32.totalorder %s97, %s113
    %p115 = scmp.eq.s32.totalorder %s16, 0
    %p116 = por %p114, %p115
    %s117 = ssub.s32 %s18, %s32
    %p118 = scmp.eq.s32.totalorder %s117, 0
    %s120 = sadd.s32 %s119, 1
    %s121 = scalar_select %p118, %s119, %s120
    %p124 = pneg %p118
    %p125 = scmp.eq.s32.totalorder %s10, 3
    %p126 = por %p124, %p125
    %p127 = scmp.ne.s32.totalorder %s119, %s122
    %p128 = scmp.eq.s32.totalorder %s10, 0
    %p129 = por %p127, %p128
    %p130 = scmp.ne.s32.totalorder %s119, %s122
    %p131 = scmp.eq.s32.totalorder %s15, 3
    %p132 = por %p130, %p131
    %p133 = scmp.ne.s32.totalorder %s122, %s123
    %p134 = scmp.eq.s32.totalorder %s15, 0
    %p135 = por %p133, %p134
    %p136 = scmp.ne.s32.totalorder %s122, %s123
    %p137 = scmp.eq.s32.totalorder %s16, 3
    %p138 = por %p136, %p137
    %p140 = scmp.ne.s32.totalorder %s123, %s139
    %p141 = scmp.eq.s32.totalorder %s16, 0
    %p142 = por %p140, %p141
    %s143 = ssub.s32 %s17, %s36
    %s144 = ssub.s32 %s18, %s32
    %s145 = sor.u32 %s143, %s144
    %p146 = scmp.eq.s32.totalorder %s145, 0
    %s148 = sadd.s32 %s147, 1
    %s149 = scalar_select %p146, %s147, %s148
    %p152 = pneg %p146
    %p153 = scmp.eq.s32.totalorder %s10, 3
    %p154 = por %p152, %p153
    %p155 = scmp.ne.s32.totalorder %s147, %s150
    %p156 = scmp.eq.s32.totalorder %s10, 0
    %p157 = por %p155, %p156
    %p158 = scmp.ne.s32.totalorder %s147, %s150
    %p159 = scmp.eq.s32.totalorder %s15, 3
    %p160 = por %p158, %p159
    %p161 = scmp.ne.s32.totalorder %s150, %s151
    %p162 = scmp.eq.s32.totalorder %s15, 0
    %p163 = por %p161, %p162
    %p164 = scmp.ne.s32.totalorder %s150, %s151
    %p165 = scmp.eq.s32.totalorder %s16, 3
    %p166 = por %p164, %p165
    %p168 = scmp.ne.s32.totalorder %s151, %s167
    %p169 = scmp.eq.s32.totalorder %s16, 0
    %p170 = por %p168, %p169
    %p171 = scmp.le.s32.totalorder 1, %s10
    %p172 = scmp.lt.s32.totalorder %s10, 5
    %p173 = pnand %p171, %p172
    %p174 = pneg %p173
    // Predicated region
    $region9: #{encoder_forward.1} parent=5 // pred_check
      _
    $region10: #{encoder_forward.1} parent=5 // pred_check_branch
      %176 = sbr.rel (%p173) target = $region12
    $region11: #{encoder_forward.1} parent=5 // pred_region
      %s177 = ssub.s32 %s10, 1
      // Predicated region
      $region13: #{encoder_forward.1} parent=11 // pred_check
        %p178 = pneg %p83
      $region14: #{encoder_forward.1} parent=11 // pred_check_branch
        %180 = sbr.rel (%p178) target = $region16
      $region15: #{encoder_forward.1} parent=11 // pred_region
        %p181 = scmp.lt.s32.totalorder %s21, 0
        %s182 = scalar_select %p181, %s21, 0
        %s183 = smul.addr %s182, 4
        %s184 = scalar_lea.vmem %s1, %s183
      $region16: #{encoder_forward.1} parent=11 // pred_fallthru
        _
      // Predicated region
      $region17: #{encoder_forward.1} parent=11 // pred_check
        %p185 = pneg %p109
      $region18: #{encoder_forward.1} parent=11 // pred_check_branch
        %187 = sbr.rel (%p185) target = $region20
      $region19: #{encoder_forward.1} parent=11 // pred_region
        %p188 = scmp.lt.s32.totalorder %s21, 0
        %s189 = scalar_select %p188, %s21, 0
        %s190 = scalar_lea.vmem %s2, %s189
      $region20: #{encoder_forward.1} parent=11 // pred_fallthru
        _
      // Predicated region
      $region21: #{encoder_forward.1} parent=11 // pred_check
        %p191 = pneg %p135
      $region22: #{encoder_forward.1} parent=11 // pred_check_branch
        %193 = sbr.rel (%p191) target = $region24
      $region23: #{encoder_forward.1} parent=11 // pred_region
        %p194 = scmp.lt.s32.totalorder %s21, 0
        %s195 = scalar_select %p194, %s21, 0
        %s196 = scalar_lea.vmem %s3, %s195
      $region24: #{encoder_forward.1} parent=11 // pred_fallthru
        _
    $region12: #{encoder_forward.1} parent=5 // pred_fallthru
      _
    %p197 = scmp.lt.s32.totalorder %s10, 4
    // Predicated region
    $region25: #{encoder_forward.1} parent=5 // pred_check
      %p198 = pneg %p197
    $region26: #{encoder_forward.1} parent=5 // pred_check_branch
      %200 = sbr.rel (%p198) target = $region28
    $region27: #{encoder_forward.1} parent=5 // pred_region
      // Predicated region
      $region29: #{encoder_forward.1} parent=27 // pred_check
        %p201 = pneg %p51
      $region30: #{encoder_forward.1} parent=27 // pred_check_branch
        %203 = sbr.rel (%p201) target = $region32
      $region31: #{encoder_forward.1} parent=27 // pred_region
        %s204 = smul.u32 16, %s19
        %p205 = scmp.lt.s32.totalorder %s204, 63
        %s206 = scalar_select %p205, %s204, 63
        %p207 = scmp.lt.s32.totalorder %s17, 0
        %s208 = scalar_select %p207, %s17, 0
        %s209 = sadd.s32 %s208, %s206
        %s210 = smul.addr %s209, 4
        %s211 = scalar_lea.vmem %s0, %s210
        %s212 = smul.u32 16, %s19
      $region32: #{encoder_forward.1} parent=27 // pred_fallthru
        _
    $region28: #{encoder_forward.1} parent=5 // pred_fallthru
      _
    %p213 = scmp.le.s32.totalorder 1, %s10
    %p214 = scmp.lt.s32.totalorder %s10, 5
    %p215 = pnand %p213, %p214
    %p216 = pneg %p215
    // Predicated region
    $region33: #{encoder_forward.1} parent=5 // pred_check
      _
    $region34: #{encoder_forward.1} parent=5 // pred_check_branch
      %218 = sbr.rel (%p215) target = $region36
    $region35: #{encoder_forward.1} parent=5 // pred_region
      %s219 = ssub.s32 %s10, 1
      %s220 = smul.u32 16, %s22
      %p221 = scmp.lt.s32.totalorder %s220, 63
      %s222 = scalar_select %p221, %s220, 63
      %p223 = scmp.lt.s32.totalorder %s20, 0
      %s224 = scalar_select %p223, %s20, 0
      %s225 = sadd.s32 %s224, %s222
      %s226 = smul.addr %s225, 4
      %s227 = scalar_lea.vmem %s0, %s226
      %p228 = pneg %p57
      %p229 = pneg %p54
      %p230 = scmp.lt.s32.totalorder %s21, 0
      %s231 = scalar_select %p230, %s21, 0
      %s232 = smul.addr %s231, 4
      %s233 = scalar_lea.vmem %s1, %s232
      %p234 = pneg %p83
      %p235 = pneg %p80
      %p236 = scmp.lt.s32.totalorder %s21, 0
      %s237 = scalar_select %p236, %s21, 0
      %s238 = scalar_lea.vmem %s2, %s237
      %p239 = pneg %p109
      %p240 = pneg %p106
      %p241 = scmp.lt.s32.totalorder %s21, 0
      %s242 = scalar_select %p241, %s21, 0
      %s243 = scalar_lea.vmem %s3, %s242
      %p244 = pneg %p135
      %p245 = pneg %p132
      %p246 = pneg %p163
      %p247 = pneg %p160
      %p248 = scmp.lt.s32.totalorder %s20, 0
      %s249 = scalar_select %p248, %s20, 0
      %p250 = scmp.lt.s32.totalorder %s21, 0
      %s251 = scalar_select %p250, %s21, 0
      %s252 = sadd.s32 %s251, %s249
      %s253 = smul.addr %s252, 8
      %s254 = scalar_lea.vmem %s4, %s253
      %s255 = smul.u32 16, %s22
      %p256 = scmp.lt.s32.totalorder %s255, 63
      %s257 = scalar_select %p256, %s255, 63
      %p258 = scmp.lt.s32.totalorder %s20, 0
      %s259 = scalar_select %p258, %s20, 0
      %s260 = sadd.s32 %s259, %s257
      %s261 = smul.addr %s260, 4
      %s262 = scalar_lea.vmem %s0, %s261
      %s263 = smul.u32 16, %s22
      %p264 = scmp.lt.s32.totalorder %s21, 0
      %s265 = scalar_select %p264, %s21, 0
      %s266 = smul.addr %s265, 4
      %s267 = scalar_lea.vmem %s1, %s266
      %p268 = scmp.lt.s32.totalorder %s21, 0
      %s269 = scalar_select %p268, %s21, 0
      %s270 = scalar_lea.vmem %s2, %s269
      %p271 = scmp.lt.s32.totalorder %s21, 0
      %s272 = scalar_select %p271, %s21, 0
      %s273 = scalar_lea.vmem %s3, %s272
      %p274 = scmp.lt.s32.totalorder %s20, 0
      %s275 = scalar_select %p274, %s20, 0
      %p276 = scmp.lt.s32.totalorder %s21, 0
      %s277 = scalar_select %p276, %s21, 0
      %s278 = sadd.s32 %s277, %s275
      %s279 = smul.addr %s278, 8
      %s280 = scalar_lea.vmem %s4, %s279
      %p282 = scmp.eq.s32.totalorder %s22, 0
      // Predicated region
      $region37: #{encoder_forward.1} parent=35 // pred_check
        %p283 = pneg %p282
      $region38: #{encoder_forward.1} parent=35 // pred_check_branch
        %285 = sbr.rel (%p283) target = $region40
      $region39: #{encoder_forward.1} parent=35 // pred_region
        %286 = vst [vmem:[#allocation2] sm:$0xff] 0.0
      $region40: #{encoder_forward.1} parent=35 // pred_fallthru
        _
      %v287 = vld [vmem:[%s262] sm:$0xf]
      %v288 = vld [vmem:[%s262 + $0x4] sm:$0xf]
      %v289 = vld [vmem:[%s262 + $0x8] sm:$0xf]
      %v290 = vld [vmem:[%s262 + $0xc] sm:$0xf]
      %v291 = vld [vmem:[%s262 + $0x10] sm:$0xf]
      %v292 = vld [vmem:[%s262 + $0x14] sm:$0xf]
      %v293 = vld [vmem:[%s262 + $0x18] sm:$0xf]
      %v294 = vld [vmem:[%s262 + $0x1c] sm:$0xf]
      %v295 = vld [vmem:[%s262 + $0x20] sm:$0xf]
      %v296 = vld [vmem:[%s262 + $0x24] sm:$0xf]
      %v297 = vld [vmem:[%s262 + $0x28] sm:$0xf]
      %v298 = vld [vmem:[%s262 + $0x2c] sm:$0xf]
      %v299 = vld [vmem:[%s262 + $0x30] sm:$0xf]
      %v300 = vld [vmem:[%s262 + $0x34] sm:$0xf]
      %v301 = vld [vmem:[%s262 + $0x38] sm:$0xf]
      %v302 = vld [vmem:[%s262 + $0x3c] sm:$0xf]
      %v303 = vld [vmem:[%s267] sm:$0xf]
      %v304 = vld [vmem:[%s267 + $0x4] sm:$0xf]
      %v305 = vld [vmem:[%s270] sm:$0x1]
      %v307 = vlaneseq
      %v308 = vshrl.u32 %v307, 7
      %v309 = vsub.s32 0, %v308
      %v310 = vrot.slane %v305, %v309
      %v328 = vunpack.c.l.b16 %v287
      %v329 = vunpack.c.l.b16 %v288
      %v330 = vunpack.c.l.b16 %v289
      %v331 = vunpack.c.l.b16 %v290
      %v332 = vunpack.c.l.b16 %v291
      %v333 = vunpack.c.l.b16 %v292
      %v334 = vunpack.c.l.b16 %v293
      %v335 = vunpack.c.l.b16 %v294
      %v336 = vunpack.c.l.b16 %v295
      %v337 = vunpack.c.l.b16 %v296
      %v338 = vunpack.c.l.b16 %v297
      %v339 = vunpack.c.l.b16 %v298
      %v340 = vunpack.c.l.b16 %v299
      %v341 = vunpack.c.l.b16 %v300
      %v342 = vunpack.c.l.b16 %v301
      %v343 = vunpack.c.l.b16 %v302
      %v344 = vpack.c.b16 %v329, %v328
      %v345 = vpack.c.b16 %v331, %v330
      %v346 = vpack.c.b16 %v333, %v332
      %v347 = vpack.c.b16 %v335, %v334
      %v348 = vpack.c.b16 %v337, %v336
      %v349 = vpack.c.b16 %v339, %v338
      %v350 = vpack.c.b16 %v341, %v340
      %v351 = vpack.c.b16 %v343, %v342
      %v354 = vunpack.c.l.b16 %v303
      %v355 = vunpack.c.l.b16 %v304
      %v356 = vpack.c.b16 %v355, %v354
      %vm358 = vcmask 130048
      %v360 = vsel %vm358, %v344, 0
      %v363 = vsel %vm358, %v345, 0
      %v366 = vsel %vm358, %v346, 0
      %v369 = vsel %vm358, %v347, 0
      %v372 = vsel %vm358, %v348, 0
      %v375 = vsel %vm358, %v349, 0
      %v378 = vsel %vm358, %v350, 0
      %v381 = vsel %vm358, %v351, 0
      %383 = vmatprep.subr.bf16.mxu0 0
      %384 = vmatpush1.bf16.msra.mxu0 0
      %385 = vmatprep.subr.bf16.mxu0 0
      %386 = vmatpush1.bf16.msra.mxu0 0
      %387 = vmatprep.subr.bf16.mxu0 0
      %388 = vmatpush1.bf16.msra.mxu0 0
      %389 = vmatprep.subr.bf16.mxu0 0
      %390 = vmatpush1.bf16.msra.mxu0 0
      %391 = vmatprep.subr.bf16.mxu0 0
      %392 = vmatpush1.bf16.msra.mxu0 0
      %393 = vmatprep.subr.bf16.mxu0 0
      %394 = vmatpush1.bf16.msra.mxu0 0
      %395 = vmatprep.subr.bf16.mxu0 0
      %396 = vmatpush1.bf16.msra.mxu0 0
      %397 = vmatprep.subr.bf16.mxu0 0
      %398 = vmatpush1.bf16.msra.mxu0 %v356
      %399 = vmatprep.subr.bf16.mxu0 0
      %400 = vmatpush2.bf16.msra.mxu0 0
      %401 = vmatprep.subr.bf16.mxu0 0
      %402 = vmatpush2.bf16.msra.mxu0 0
      %403 = vmatprep.subr.bf16.mxu0 0
      %404 = vmatpush2.bf16.msra.mxu0 0
      %405 = vmatprep.subr.bf16.mxu0 0
      %406 = vmatpush2.bf16.msra.mxu0 0
      %407 = vmatprep.subr.bf16.mxu0 0
      %408 = vmatpush2.bf16.msra.mxu0 0
      %409 = vmatprep.subr.bf16.mxu0 0
      %410 = vmatpush2.bf16.msra.mxu0 0
      %411 = vmatprep.subr.bf16.mxu0 0
      %412 = vmatpush2.bf16.msra.mxu0 0
      %413 = vmatprep.subr.bf16.mxu0 0
      %414 = vmatpush2.bf16.msra.mxu0 0
      %415 = vmatprep.mubr.bf16.mxu0 0
      %416 = vmatmul.mubr.bf16.gmra.mxu0 %v360
      %v417 = vpop.f32.mrf.mxu0
      %v418 = vadd.f32 %v310, %v417
      %v419 = vpop.f32.mrf.mxu0
      %v420 = vpop.f32.mrf.mxu0
      %v421 = vadd.f32 %v310, %v420
      %v422 = vpop.f32.mrf.mxu0
      %423 = vmatprep.mubr.bf16.mxu0 0
      %424 = vmatmul.mubr.bf16.gmra.mxu0 %v363
      %v425 = vpop.f32.mrf.mxu0
      %v426 = vadd.f32 %v310, %v425
      %v427 = vpop.f32.mrf.mxu0
      %v428 = vpop.f32.mrf.mxu0
      %v429 = vadd.f32 %v310, %v428
      %v430 = vpop.f32.mrf.mxu0
      %431 = vmatprep.mubr.bf16.mxu0 0
      %432 = vmatmul.mubr.bf16.gmra.mxu0 %v366
      %v433 = vpop.f32.mrf.mxu0
      %v434 = vadd.f32 %v310, %v433
      %v435 = vpop.f32.mrf.mxu0
      %v436 = vpop.f32.mrf.mxu0
      %v437 = vadd.f32 %v310, %v436
      %v438 = vpop.f32.mrf.mxu0
      %439 = vmatprep.mubr.bf16.mxu0 0
      %440 = vmatmul.mubr.bf16.gmra.mxu0 %v369
      %v441 = vpop.f32.mrf.mxu0
      %v442 = vadd.f32 %v310, %v441
      %v443 = vpop.f32.mrf.mxu0
      %v444 = vpop.f32.mrf.mxu0
      %v445 = vadd.f32 %v310, %v444
      %v446 = vpop.f32.mrf.mxu0
      %447 = vmatprep.mubr.bf16.mxu0 0
      %448 = vmatmul.mubr.bf16.gmra.mxu0 %v372
      %v449 = vpop.f32.mrf.mxu0
      %v450 = vadd.f32 %v310, %v449
      %v451 = vpop.f32.mrf.mxu0
      %v452 = vpop.f32.mrf.mxu0
      %v453 = vadd.f32 %v310, %v452
      %v454 = vpop.f32.mrf.mxu0
      %455 = vmatprep.mubr.bf16.mxu0 0
      %456 = vmatmul.mubr.bf16.gmra.mxu0 %v375
      %v457 = vpop.f32.mrf.mxu0
      %v458 = vadd.f32 %v310, %v457
      %v459 = vpop.f32.mrf.mxu0
      %v460 = vpop.f32.mrf.mxu0
      %v461 = vadd.f32 %v310, %v460
      %v462 = vpop.f32.mrf.mxu0
      %463 = vmatprep.mubr.bf16.mxu0 0
      %464 = vmatmul.mubr.bf16.gmra.mxu0 %v378
      %v465 = vpop.f32.mrf.mxu0
      %v466 = vadd.f32 %v310, %v465
      %v467 = vpop.f32.mrf.mxu0
      %v468 = vpop.f32.mrf.mxu0
      %v469 = vadd.f32 %v310, %v468
      %v470 = vpop.f32.mrf.mxu0
      %471 = vmatprep.mubr.bf16.mxu0 0
      %472 = vmatmul.mubr.bf16.gmra.mxu0 %v381
      %v473 = vpop.f32.mrf.mxu0
      %v474 = vadd.f32 %v310, %v473
      %v475 = vpop.f32.mrf.mxu0
      %v476 = vpop.f32.mrf.mxu0
      %v477 = vadd.f32 %v310, %v476
      %v478 = vpop.f32.mrf.mxu0
      %479 = vdwg.mxu0
      %v480 = vand.u32 2147483647, %v418
      %vm481 = vcmp.le.f32.partialorder %v480, 0.7853982
      %vm482 = vcmp.lt.s32.totalorder %v418, 0
      %v483 = vand.u32 %v418, 2139095040
      %v484 = vshrl.u32 %v483, 23
      %v485 = vsub.s32 %v484, 127
      %v486 = vand.u32 2147483647, %v418
      %v487 = vand.u32 %v486, 8388607
      %v488 = vor.u32 %v487, 8388608
      %v489 = vsub.s32 0, %v488
      %v490 = vadd.s32 %v485, 1
      %vm491 = vcmp.gt.s32.totalorder %v490, 0
      %v492 = vsel %vm491, %v490, 0
      %v493 = vshrl.u32 %v492, 5
      %v494 = vand.u32 %v492, 31
      %v495 = vsub.s32 32, %v494
      %v496 = vshrl.u32 683565275, %v495
      %v497 = vshll.u32 683565275, %v494
      %v498 = vshrl.u32 2475754826, %v495
      %v499 = vor.u32 %v497, %v498
      %v500 = vshll.u32 2475754826, %v494
      %v501 = vshrl.u32 2131351028, %v495
      %v502 = vor.u32 %v500, %v501
      %v503 = vshll.u32 2131351028, %v494
      %v504 = vshrl.u32 2102212464, %v495
      %v505 = vor.u32 %v503, %v504
      %v506 = vshll.u32 2102212464, %v494
      %v507 = vshrl.u32 920167782, %v495
      %v508 = vor.u32 %v506, %v507
      %v509 = vshll.u32 920167782, %v494
      %v510 = vshrl.u32 1326507024, %v495
      %v511 = vor.u32 %v509, %v510
      %vm512 = vcmp.lt.s32.totalorder %v493, 1
      %vm513 = vcmp.lt.s32.totalorder %v493, 2
      %vm514 = vcmp.lt.s32.totalorder %v493, 3
      %vm515 = vcmp.lt.s32.totalorder %v493, 4
      %v516 = vsel %vm512, %v496, %v499
      %v517 = vsel %vm515, %v505, 2102212464
      %v518 = vsel %vm514, %v502, %v517
      %v519 = vsel %vm513, %v516, %v518
      %v520 = vsel %vm512, %v499, %v502
      %v521 = vsel %vm515, %v508, 920167782
      %v522 = vsel %vm514, %v505, %v521
      %v523 = vsel %vm513, %v520, %v522
      %v524 = vsel %vm512, %v502, %v505
      %v525 = vsel %vm515, %v511, 1326507024
      %v526 = vsel %vm514, %v508, %v525
      %v527 = vsel %vm513, %v524, %v526
      %v528 = vshll.u32 %v488, 8
      %v529 = vmul.u32.u64.compose %v528, %v527
      %v530 = vextract.low.u32 %v529
      %v531 = vextract.high.u32 %v529
      %v532 = vmul.u32.u64.compose %v528, %v523
      %v533 = vextract.low.u32 %v532
      %v534 = vextract.high.u32 %v532
      %v535 = vmul.u32 %v528, %v519
      %v536 = vadd.s32 %v531, %v533
      %vm537 = vc.u32 %v531, %v533
      %v538 = vadd.s32 %v534, 1
      %v539 = vsel %vm537, %v538, %v534
      %v540 = vadd.s32 %v535, %v539
      %v541 = vadd.s32 %v540, 536870912
      %v542 = vshrl.u32 %v541, 30
      %v543 = vshll.u32 %v542, 30
      %v544 = vsub.s32 %v540, %v543
      %vm545 = vcmp.lt.s32.totalorder %v544, 0
      %v546 = vsub.s32 0, %v544
      %v547 = vsel %vm545, %v546, %v544
      %v548 = vclz %v547
      %v549 = vsub.s32 %v548, 2
      %vm550 = vcmp.gt.s32.totalorder 0, %v549
      %v551 = vsel %vm550, 0, %v549
      %v552 = vsub.s32 32, %v551
      %v553 = vshll.u32 %v544, %v551
      %v554 = vshrl.u32 %v536, %v552
      %v555 = vor.u32 %v553, %v554
      %v556 = vsub.s32 4294967266, %v551
      %v557 = vadd.s32 %v556, 127
      %v558 = vshll.u32 %v557, 23
      %v559 = vor.u32 4788187, %v558
      %v560 = vand.u32 2147483647, %v559
      %v562 = vcvt.s32.f32 %v555
      %v563 = vmul.f32 %v562, %v560
      %v564 = vxor.u32 %v563, 2147483648
      %v565 = vsel %vm482, %v564, %v563
      %v566 = vsub.s32 4, %v542
      %v567 = vsel %vm482, %v566, %v542
      %v568 = vsel %vm481, %v418, %v565
      %v569 = vsel %vm481, 0, %v567
      %v570 = vcosq.f32.pop %v568
      %v571 = vsinq.f32.pop %v568
      %vm572 = vweird.f32 %v418
      %v573 = vadd.s32 %v569, 3
      %v574 = vand.u32 %v573, 3
      %vm575 = vcmp.lt.s32.totalorder %v574, 2
      %vm576 = vcmp.eq.s32.totalorder %v574, 0
      %v577 = vxor.u32 %v571, 2147483648
      %v578 = vsel %vm576, %v570, %v577
      %vm579 = vcmp.eq.s32.totalorder %v574, 2
      %v580 = vxor.u32 %v570, 2147483648
      %v581 = vsel %vm579, %v580, %v571
      %v582 = vsel %vm575, %v578, %v581
      %v583 = vsel %vm572, nan, %v582
      %v584 = vand.u32 2147483647, %v421
      %vm585 = vcmp.le.f32.partialorder %v584, 0.7853982
      %vm586 = vcmp.lt.s32.totalorder %v421, 0
      %v587 = vand.u32 %v421, 2139095040
      %v588 = vshrl.u32 %v587, 23
      %v589 = vsub.s32 %v588, 127
      %v590 = vand.u32 2147483647, %v421
      %v591 = vand.u32 %v590, 8388607
      %v592 = vor.u32 %v591, 8388608
      %v593 = vsub.s32 0, %v592
      %v594 = vadd.s32 %v589, 1
      %vm595 = vcmp.gt.s32.totalorder %v594, 0
      %v596 = vsel %vm595, %v594, 0
      %v597 = vshrl.u32 %v596, 5
      %v598 = vand.u32 %v596, 31
      %v599 = vsub.s32 32, %v598
      %v600 = vshrl.u32 683565275, %v599
      %v601 = vshll.u32 683565275, %v598
      %v602 = vshrl.u32 2475754826, %v599
      %v603 = vor.u32 %v601, %v602
      %v604 = vshll.u32 2475754826, %v598
      %v605 = vshrl.u32 2131351028, %v599
      %v606 = vor.u32 %v604, %v605
      %v607 = vshll.u32 2131351028, %v598
      %v608 = vshrl.u32 2102212464, %v599
      %v609 = vor.u32 %v607, %v608
      %v610 = vshll.u32 2102212464, %v598
      %v611 = vshrl.u32 920167782, %v599
      %v612 = vor.u32 %v610, %v611
      %v613 = vshll.u32 920167782, %v598
      %v614 = vshrl.u32 1326507024, %v599
      %v615 = vor.u32 %v613, %v614
      %vm616 = vcmp.lt.s32.totalorder %v597, 1
      %vm617 = vcmp.lt.s32.totalorder %v597, 2
      %vm618 = vcmp.lt.s32.totalorder %v597, 3
      %vm619 = vcmp.lt.s32.totalorder %v597, 4
      %v620 = vsel %vm616, %v600, %v603
      %v621 = vsel %vm619, %v609, 2102212464
      %v622 = vsel %vm618, %v606, %v621
      %v623 = vsel %vm617, %v620, %v622
      %v624 = vsel %vm616, %v603, %v606
      %v625 = vsel %vm619, %v612, 920167782
      %v626 = vsel %vm618, %v609, %v625
      %v627 = vsel %vm617, %v624, %v626
      %v628 = vsel %vm616, %v606, %v609
      %v629 = vsel %vm619, %v615, 1326507024
      %v630 = vsel %vm618, %v612, %v629
      %v631 = vsel %vm617, %v628, %v630
      %v632 = vshll.u32 %v592, 8
      %v633 = vmul.u32.u64.compose %v632, %v631
      %v634 = vextract.low.u32 %v633
      %v635 = vextract.high.u32 %v633
      %v636 = vmul.u32.u64.compose %v632, %v627
      %v637 = vextract.low.u32 %v636
      %v638 = vextract.high.u32 %v636
      %v639 = vmul.u32 %v632, %v623
      %v640 = vadd.s32 %v635, %v637
      %vm641 = vc.u32 %v635, %v637
      %v642 = vadd.s32 %v638, 1
      %v643 = vsel %vm641, %v642, %v638
      %v644 = vadd.s32 %v639, %v643
      %v645 = vadd.s32 %v644, 536870912
      %v646 = vshrl.u32 %v645, 30
      %v647 = vshll.u32 %v646, 30
      %v648 = vsub.s32 %v644, %v647
      %vm649 = vcmp.lt.s32.totalorder %v648, 0
      %v650 = vsub.s32 0, %v648
      %v651 = vsel %vm649, %v650, %v648
      %v652 = vclz %v651
      %v653 = vsub.s32 %v652, 2
      %vm654 = vcmp.gt.s32.totalorder 0, %v653
      %v655 = vsel %vm654, 0, %v653
      %v656 = vsub.s32 32, %v655
      %v657 = vshll.u32 %v648, %v655
      %v658 = vshrl.u32 %v640, %v656
      %v659 = vor.u32 %v657, %v658
      %v660 = vsub.s32 4294967266, %v655
      %v661 = vadd.s32 %v660, 127
      %v662 = vshll.u32 %v661, 23
      %v663 = vor.u32 4788187, %v662
      %v664 = vand.u32 2147483647, %v663
      %v666 = vcvt.s32.f32 %v659
      %v667 = vmul.f32 %v666, %v664
      %v668 = vxor.u32 %v667, 2147483648
      %v669 = vsel %vm586, %v668, %v667
      %v670 = vsub.s32 4, %v646
      %v671 = vsel %vm586, %v670, %v646
      %v672 = vsel %vm585, %v421, %v669
      %v673 = vsel %vm585, 0, %v671
      %v674 = vcosq.f32.pop %v672
      %v675 = vsinq.f32.pop %v672
      %vm676 = vweird.f32 %v421
      %v677 = vadd.s32 %v673, 3
      %v678 = vand.u32 %v677, 3
      %vm679 = vcmp.lt.s32.totalorder %v678, 2
      %vm680 = vcmp.eq.s32.totalorder %v678, 0
      %v681 = vxor.u32 %v675, 2147483648
      %v682 = vsel %vm680, %v674, %v681
      %vm683 = vcmp.eq.s32.totalorder %v678, 2
      %v684 = vxor.u32 %v674, 2147483648
      %v685 = vsel %vm683, %v684, %v675
      %v686 = vsel %vm679, %v682, %v685
      %v687 = vsel %vm676, nan, %v686
      %v688 = vand.u32 2147483647, %v426
      %vm689 = vcmp.le.f32.partialorder %v688, 0.7853982
      %vm690 = vcmp.lt.s32.totalorder %v426, 0
      %v691 = vand.u32 %v426, 2139095040
      %v692 = vshrl.u32 %v691, 23
      %v693 = vsub.s32 %v692, 127
      %v694 = vand.u32 2147483647, %v426
      %v695 = vand.u32 %v694, 8388607
      %v696 = vor.u32 %v695, 8388608
      %v697 = vsub.s32 0, %v696
      %v698 = vadd.s32 %v693, 1
      %vm699 = vcmp.gt.s32.totalorder %v698, 0
      %v700 = vsel %vm699, %v698, 0
      %v701 = vshrl.u32 %v700, 5
      %v702 = vand.u32 %v700, 31
      %v703 = vsub.s32 32, %v702
      %v704 = vshrl.u32 683565275, %v703
      %v705 = vshll.u32 683565275, %v702
      %v706 = vshrl.u32 2475754826, %v703
      %v707 = vor.u32 %v705, %v706
      %v708 = vshll.u32 2475754826, %v702
      %v709 = vshrl.u32 2131351028, %v703
      %v710 = vor.u32 %v708, %v709
      %v711 = vshll.u32 2131351028, %v702
      %v712 = vshrl.u32 2102212464, %v703
      %v713 = vor.u32 %v711, %v712
      %v714 = vshll.u32 2102212464, %v702
      %v715 = vshrl.u32 920167782, %v703
      %v716 = vor.u32 %v714, %v715
      %v717 = vshll.u32 920167782, %v702
      %v718 = vshrl.u32 1326507024, %v703
      %v719 = vor.u32 %v717, %v718
      %vm720 = vcmp.lt.s32.totalorder %v701, 1
      %vm721 = vcmp.lt.s32.totalorder %v701, 2
      %vm722 = vcmp.lt.s32.totalorder %v701, 3
      %vm723 = vcmp.lt.s32.totalorder %v701, 4
      %v724 = vsel %vm720, %v704, %v707
      %v725 = vsel %vm723, %v713, 2102212464
      %v726 = vsel %vm722, %v710, %v725
      %v727 = vsel %vm721, %v724, %v726
      %v728 = vsel %vm720, %v707, %v710
      %v729 = vsel %vm723, %v716, 920167782
      %v730 = vsel %vm722, %v713, %v729
      %v731 = vsel %vm721, %v728, %v730
      %v732 = vsel %vm720, %v710, %v713
      %v733 = vsel %vm723, %v719, 1326507024
      %v734 = vsel %vm722, %v716, %v733
      %v735 = vsel %vm721, %v732, %v734
      %v736 = vshll.u32 %v696, 8
      %v737 = vmul.u32.u64.compose %v736, %v735
      %v738 = vextract.low.u32 %v737
      %v739 = vextract.high.u32 %v737
      %v740 = vmul.u32.u64.compose %v736, %v731
      %v741 = vextract.low.u32 %v740
      %v742 = vextract.high.u32 %v740
      %v743 = vmul.u32 %v736, %v727
      %v744 = vadd.s32 %v739, %v741
      %vm745 = vc.u32 %v739, %v741
      %v746 = vadd.s32 %v742, 1
      %v747 = vsel %vm745, %v746, %v742
      %v748 = vadd.s32 %v743, %v747
      %v749 = vadd.s32 %v748, 536870912
      %v750 = vshrl.u32 %v749, 30
      %v751 = vshll.u32 %v750, 30
      %v752 = vsub.s32 %v748, %v751
      %vm753 = vcmp.lt.s32.totalorder %v752, 0
      %v754 = vsub.s32 0, %v752
      %v755 = vsel %vm753, %v754, %v752
      %v756 = vclz %v755
      %v757 = vsub.s32 %v756, 2
      %vm758 = vcmp.gt.s32.totalorder 0, %v757
      %v759 = vsel %vm758, 0, %v757
      %v760 = vsub.s32 32, %v759
      %v761 = vshll.u32 %v752, %v759
      %v762 = vshrl.u32 %v744, %v760
      %v763 = vor.u32 %v761, %v762
      %v764 = vsub.s32 4294967266, %v759
      %v765 = vadd.s32 %v764, 127
      %v766 = vshll.u32 %v765, 23
      %v767 = vor.u32 4788187, %v766
      %v768 = vand.u32 2147483647, %v767
      %v770 = vcvt.s32.f32 %v763
      %v771 = vmul.f32 %v770, %v768
      %v772 = vxor.u32 %v771, 2147483648
      %v773 = vsel %vm690, %v772, %v771
      %v774 = vsub.s32 4, %v750
      %v775 = vsel %vm690, %v774, %v750
      %v776 = vsel %vm689, %v426, %v773
      %v777 = vsel %vm689, 0, %v775
      %v778 = vcosq.f32.pop %v776
      %v779 = vsinq.f32.pop %v776
      %vm780 = vweird.f32 %v426
      %v781 = vadd.s32 %v777, 3
      %v782 = vand.u32 %v781, 3
      %vm783 = vcmp.lt.s32.totalorder %v782, 2
      %vm784 = vcmp.eq.s32.totalorder %v782, 0
      %v785 = vxor.u32 %v779, 2147483648
      %v786 = vsel %vm784, %v778, %v785
      %vm787 = vcmp.eq.s32.totalorder %v782, 2
      %v788 = vxor.u32 %v778, 2147483648
      %v789 = vsel %vm787, %v788, %v779
      %v790 = vsel %vm783, %v786, %v789
      %v791 = vsel %vm780, nan, %v790
      %v792 = vand.u32 2147483647, %v429
      %vm793 = vcmp.le.f32.partialorder %v792, 0.7853982
      %vm794 = vcmp.lt.s32.totalorder %v429, 0
      %v795 = vand.u32 %v429, 2139095040
      %v796 = vshrl.u32 %v795, 23
      %v797 = vsub.s32 %v796, 127
      %v798 = vand.u32 2147483647, %v429
      %v799 = vand.u32 %v798, 8388607
      %v800 = vor.u32 %v799, 8388608
      %v801 = vsub.s32 0, %v800
      %v802 = vadd.s32 %v797, 1
      %vm803 = vcmp.gt.s32.totalorder %v802, 0
      %v804 = vsel %vm803, %v802, 0
      %v805 = vshrl.u32 %v804, 5
      %v806 = vand.u32 %v804, 31
      %v807 = vsub.s32 32, %v806
      %v808 = vshrl.u32 683565275, %v807
      %v809 = vshll.u32 683565275, %v806
      %v810 = vshrl.u32 2475754826, %v807
      %v811 = vor.u32 %v809, %v810
      %v812 = vshll.u32 2475754826, %v806
      %v813 = vshrl.u32 2131351028, %v807
      %v814 = vor.u32 %v812, %v813
      %v815 = vshll.u32 2131351028, %v806
      %v816 = vshrl.u32 2102212464, %v807
      %v817 = vor.u32 %v815, %v816
      %v818 = vshll.u32 2102212464, %v806
      %v819 = vshrl.u32 920167782, %v807
      %v820 = vor.u32 %v818, %v819
      %v821 = vshll.u32 920167782, %v806
      %v822 = vshrl.u32 1326507024, %v807
      %v823 = vor.u32 %v821, %v822
      %vm824 = vcmp.lt.s32.totalorder %v805, 1
      %vm825 = vcmp.lt.s32.totalorder %v805, 2
      %vm826 = vcmp.lt.s32.totalorder %v805, 3
      %vm827 = vcmp.lt.s32.totalorder %v805, 4
      %v828 = vsel %vm824, %v808, %v811
      %v829 = vsel %vm827, %v817, 2102212464
      %v830 = vsel %vm826, %v814, %v829
      %v831 = vsel %vm825, %v828, %v830
      %v832 = vsel %vm824, %v811, %v814
      %v833 = vsel %vm827, %v820, 920167782
      %v834 = vsel %vm826, %v817, %v833
      %v835 = vsel %vm825, %v832, %v834
      %v836 = vsel %vm824, %v814, %v817
      %v837 = vsel %vm827, %v823, 1326507024
      %v838 = vsel %vm826, %v820, %v837
      %v839 = vsel %vm825, %v836, %v838
      %v840 = vshll.u32 %v800, 8
      %v841 = vmul.u32.u64.compose %v840, %v839
      %v842 = vextract.low.u32 %v841
      %v843 = vextract.high.u32 %v841
      %v844 = vmul.u32.u64.compose %v840, %v835
      %v845 = vextract.low.u32 %v844
      %v846 = vextract.high.u32 %v844
      %v847 = vmul.u32 %v840, %v831
      %v848 = vadd.s32 %v843, %v845
      %vm849 = vc.u32 %v843, %v845
      %v850 = vadd.s32 %v846, 1
      %v851 = vsel %vm849, %v850, %v846
      %v852 = vadd.s32 %v847, %v851
      %v853 = vadd.s32 %v852, 536870912
      %v854 = vshrl.u32 %v853, 30
      %v855 = vshll.u32 %v854, 30
      %v856 = vsub.s32 %v852, %v855
      %vm857 = vcmp.lt.s32.totalorder %v856, 0
      %v858 = vsub.s32 0, %v856
      %v859 = vsel %vm857, %v858, %v856
      %v860 = vclz %v859
      %v861 = vsub.s32 %v860, 2
      %vm862 = vcmp.gt.s32.totalorder 0, %v861
      %v863 = vsel %vm862, 0, %v861
      %v864 = vsub.s32 32, %v863
      %v865 = vshll.u32 %v856, %v863
      %v866 = vshrl.u32 %v848, %v864
      %v867 = vor.u32 %v865, %v866
      %v868 = vsub.s32 4294967266, %v863
      %v869 = vadd.s32 %v868, 127
      %v870 = vshll.u32 %v869, 23
      %v871 = vor.u32 4788187, %v870
      %v872 = vand.u32 2147483647, %v871
      %v874 = vcvt.s32.f32 %v867
      %v875 = vmul.f32 %v874, %v872
      %v876 = vxor.u32 %v875, 2147483648
      %v877 = vsel %vm794, %v876, %v875
      %v878 = vsub.s32 4, %v854
      %v879 = vsel %vm794, %v878, %v854
      %v880 = vsel %vm793, %v429, %v877
      %v881 = vsel %vm793, 0, %v879
      %v882 = vcosq.f32.pop %v880
      %v883 = vsinq.f32.pop %v880
      %vm884 = vweird.f32 %v429
      %v885 = vadd.s32 %v881, 3
      %v886 = vand.u32 %v885, 3
      %vm887 = vcmp.lt.s32.totalorder %v886, 2
      %vm888 = vcmp.eq.s32.totalorder %v886, 0
      %v889 = vxor.u32 %v883, 2147483648
      %v890 = vsel %vm888, %v882, %v889
      %vm891 = vcmp.eq.s32.totalorder %v886, 2
      %v892 = vxor.u32 %v882, 2147483648
      %v893 = vsel %vm891, %v892, %v883
      %v894 = vsel %vm887, %v890, %v893
      %v895 = vsel %vm884, nan, %v894
      %v896 = vand.u32 2147483647, %v434
      %vm897 = vcmp.le.f32.partialorder %v896, 0.7853982
      %vm898 = vcmp.lt.s32.totalorder %v434, 0
      %v899 = vand.u32 %v434, 2139095040
      %v900 = vshrl.u32 %v899, 23
      %v901 = vsub.s32 %v900, 127
      %v902 = vand.u32 2147483647, %v434
      %v903 = vand.u32 %v902, 8388607
      %v904 = vor.u32 %v903, 8388608
      %v905 = vsub.s32 0, %v904
      %v906 = vadd.s32 %v901, 1
      %vm907 = vcmp.gt.s32.totalorder %v906, 0
      %v908 = vsel %vm907, %v906, 0
      %v909 = vshrl.u32 %v908, 5
      %v910 = vand.u32 %v908, 31
      %v911 = vsub.s32 32, %v910
      %v912 = vshrl.u32 683565275, %v911
      %v913 = vshll.u32 683565275, %v910
      %v914 = vshrl.u32 2475754826, %v911
      %v915 = vor.u32 %v913, %v914
      %v916 = vshll.u32 2475754826, %v910
      %v917 = vshrl.u32 2131351028, %v911
      %v918 = vor.u32 %v916, %v917
      %v919 = vshll.u32 2131351028, %v910
      %v920 = vshrl.u32 2102212464, %v911
      %v921 = vor.u32 %v919, %v920
      %v922 = vshll.u32 2102212464, %v910
      %v923 = vshrl.u32 920167782, %v911
      %v924 = vor.u32 %v922, %v923
      %v925 = vshll.u32 920167782, %v910
      %v926 = vshrl.u32 1326507024, %v911
      %v927 = vor.u32 %v925, %v926
      %vm928 = vcmp.lt.s32.totalorder %v909, 1
      %vm929 = vcmp.lt.s32.totalorder %v909, 2
      %vm930 = vcmp.lt.s32.totalorder %v909, 3
      %vm931 = vcmp.lt.s32.totalorder %v909, 4
      %v932 = vsel %vm928, %v912, %v915
      %v933 = vsel %vm931, %v921, 2102212464
      %v934 = vsel %vm930, %v918, %v933
      %v935 = vsel %vm929, %v932, %v934
      %v936 = vsel %vm928, %v915, %v918
      %v937 = vsel %vm931, %v924, 920167782
      %v938 = vsel %vm930, %v921, %v937
      %v939 = vsel %vm929, %v936, %v938
      %v940 = vsel %vm928, %v918, %v921
      %v941 = vsel %vm931, %v927, 1326507024
      %v942 = vsel %vm930, %v924, %v941
      %v943 = vsel %vm929, %v940, %v942
      %v944 = vshll.u32 %v904, 8
      %v945 = vmul.u32.u64.compose %v944, %v943
      %v946 = vextract.low.u32 %v945
      %v947 = vextract.high.u32 %v945
      %v948 = vmul.u32.u64.compose %v944, %v939
      %v949 = vextract.low.u32 %v948
      %v950 = vextract.high.u32 %v948
      %v951 = vmul.u32 %v944, %v935
      %v952 = vadd.s32 %v947, %v949
      %vm953 = vc.u32 %v947, %v949
      %v954 = vadd.s32 %v950, 1
      %v955 = vsel %vm953, %v954, %v950
      %v956 = vadd.s32 %v951, %v955
      %v957 = vadd.s32 %v956, 536870912
      %v958 = vshrl.u32 %v957, 30
      %v959 = vshll.u32 %v958, 30
      %v960 = vsub.s32 %v956, %v959
      %vm961 = vcmp.lt.s32.totalorder %v960, 0
      %v962 = vsub.s32 0, %v960
      %v963 = vsel %vm961, %v962, %v960
      %v964 = vclz %v963
      %v965 = vsub.s32 %v964, 2
      %vm966 = vcmp.gt.s32.totalorder 0, %v965
      %v967 = vsel %vm966, 0, %v965
      %v968 = vsub.s32 32, %v967
      %v969 = vshll.u32 %v960, %v967
      %v970 = vshrl.u32 %v952, %v968
      %v971 = vor.u32 %v969, %v970
      %v972 = vsub.s32 4294967266, %v967
      %v973 = vadd.s32 %v972, 127
      %v974 = vshll.u32 %v973, 23
      %v975 = vor.u32 4788187, %v974
      %v976 = vand.u32 2147483647, %v975
      %v978 = vcvt.s32.f32 %v971
      %v979 = vmul.f32 %v978, %v976
      %v980 = vxor.u32 %v979, 2147483648
      %v981 = vsel %vm898, %v980, %v979
      %v982 = vsub.s32 4, %v958
      %v983 = vsel %vm898, %v982, %v958
      %v984 = vsel %vm897, %v434, %v981
      %v985 = vsel %vm897, 0, %v983
      %v986 = vcosq.f32.pop %v984
      %v987 = vsinq.f32.pop %v984
      %vm988 = vweird.f32 %v434
      %v989 = vadd.s32 %v985, 3
      %v990 = vand.u32 %v989, 3
      %vm991 = vcmp.lt.s32.totalorder %v990, 2
      %vm992 = vcmp.eq.s32.totalorder %v990, 0
      %v993 = vxor.u32 %v987, 2147483648
      %v994 = vsel %vm992, %v986, %v993
      %vm995 = vcmp.eq.s32.totalorder %v990, 2
      %v996 = vxor.u32 %v986, 2147483648
      %v997 = vsel %vm995, %v996, %v987
      %v998 = vsel %vm991, %v994, %v997
      %v999 = vsel %vm988, nan, %v998
      %v1000 = vand.u32 2147483647, %v437
      %vm1001 = vcmp.le.f32.partialorder %v1000, 0.7853982
      %vm1002 = vcmp.lt.s32.totalorder %v437, 0
      %v1003 = vand.u32 %v437, 2139095040
      %v1004 = vshrl.u32 %v1003, 23
      %v1005 = vsub.s32 %v1004, 127
      %v1006 = vand.u32 2147483647, %v437
      %v1007 = vand.u32 %v1006, 8388607
      %v1008 = vor.u32 %v1007, 8388608
      %v1009 = vsub.s32 0, %v1008
      %v1010 = vadd.s32 %v1005, 1
      %vm1011 = vcmp.gt.s32.totalorder %v1010, 0
      %v1012 = vsel %vm1011, %v1010, 0
      %v1013 = vshrl.u32 %v1012, 5
      %v1014 = vand.u32 %v1012, 31
      %v1015 = vsub.s32 32, %v1014
      %v1016 = vshrl.u32 683565275, %v1015
      %v1017 = vshll.u32 683565275, %v1014
      %v1018 = vshrl.u32 2475754826, %v1015
      %v1019 = vor.u32 %v1017, %v1018
      %v1020 = vshll.u32 2475754826, %v1014
      %v1021 = vshrl.u32 2131351028, %v1015
      %v1022 = vor.u32 %v1020, %v1021
      %v1023 = vshll.u32 2131351028, %v1014
      %v1024 = vshrl.u32 2102212464, %v1015
      %v1025 = vor.u32 %v1023, %v1024
      %v1026 = vshll.u32 2102212464, %v1014
      %v1027 = vshrl.u32 920167782, %v1015
      %v1028 = vor.u32 %v1026, %v1027
      %v1029 = vshll.u32 920167782, %v1014
      %v1030 = vshrl.u32 1326507024, %v1015
      %v1031 = vor.u32 %v1029, %v1030
      %vm1032 = vcmp.lt.s32.totalorder %v1013, 1
      %vm1033 = vcmp.lt.s32.totalorder %v1013, 2
      %vm1034 = vcmp.lt.s32.totalorder %v1013, 3
      %vm1035 = vcmp.lt.s32.totalorder %v1013, 4
      %v1036 = vsel %vm1032, %v1016, %v1019
      %v1037 = vsel %vm1035, %v1025, 2102212464
      %v1038 = vsel %vm1034, %v1022, %v1037
      %v1039 = vsel %vm1033, %v1036, %v1038
      %v1040 = vsel %vm1032, %v1019, %v1022
      %v1041 = vsel %vm1035, %v1028, 920167782
      %v1042 = vsel %vm1034, %v1025, %v1041
      %v1043 = vsel %vm1033, %v1040, %v1042
      %v1044 = vsel %vm1032, %v1022, %v1025
      %v1045 = vsel %vm1035, %v1031, 1326507024
      %v1046 = vsel %vm1034, %v1028, %v1045
      %v1047 = vsel %vm1033, %v1044, %v1046
      %v1048 = vshll.u32 %v1008, 8
      %v1049 = vmul.u32.u64.compose %v1048, %v1047
      %v1050 = vextract.low.u32 %v1049
      %v1051 = vextract.high.u32 %v1049
      %v1052 = vmul.u32.u64.compose %v1048, %v1043
      %v1053 = vextract.low.u32 %v1052
      %v1054 = vextract.high.u32 %v1052
      %v1055 = vmul.u32 %v1048, %v1039
      %v1056 = vadd.s32 %v1051, %v1053
      %vm1057 = vc.u32 %v1051, %v1053
      %v1058 = vadd.s32 %v1054, 1
      %v1059 = vsel %vm1057, %v1058, %v1054
      %v1060 = vadd.s32 %v1055, %v1059
      %v1061 = vadd.s32 %v1060, 536870912
      %v1062 = vshrl.u32 %v1061, 30
      %v1063 = vshll.u32 %v1062, 30
      %v1064 = vsub.s32 %v1060, %v1063
      %vm1065 = vcmp.lt.s32.totalorder %v1064, 0
      %v1066 = vsub.s32 0, %v1064
      %v1067 = vsel %vm1065, %v1066, %v1064
      %v1068 = vclz %v1067
      %v1069 = vsub.s32 %v1068, 2
      %vm1070 = vcmp.gt.s32.totalorder 0, %v1069
      %v1071 = vsel %vm1070, 0, %v1069
      %v1072 = vsub.s32 32, %v1071
      %v1073 = vshll.u32 %v1064, %v1071
      %v1074 = vshrl.u32 %v1056, %v1072
      %v1075 = vor.u32 %v1073, %v1074
      %v1076 = vsub.s32 4294967266, %v1071
      %v1077 = vadd.s32 %v1076, 127
      %v1078 = vshll.u32 %v1077, 23
      %v1079 = vor.u32 4788187, %v1078
      %v1080 = vand.u32 2147483647, %v1079
      %v1082 = vcvt.s32.f32 %v1075
      %v1083 = vmul.f32 %v1082, %v1080
      %v1084 = vxor.u32 %v1083, 2147483648
      %v1085 = vsel %vm1002, %v1084, %v1083
      %v1086 = vsub.s32 4, %v1062
      %v1087 = vsel %vm1002, %v1086, %v1062
      %v1088 = vsel %vm1001, %v437, %v1085
      %v1089 = vsel %vm1001, 0, %v1087
      %v1090 = vcosq.f32.pop %v1088
      %v1091 = vsinq.f32.pop %v1088
      %vm1092 = vweird.f32 %v437
      %v1093 = vadd.s32 %v1089, 3
      %v1094 = vand.u32 %v1093, 3
      %vm1095 = vcmp.lt.s32.totalorder %v1094, 2
      %vm1096 = vcmp.eq.s32.totalorder %v1094, 0
      %v1097 = vxor.u32 %v1091, 2147483648
      %v1098 = vsel %vm1096, %v1090, %v1097
      %vm1099 = vcmp.eq.s32.totalorder %v1094, 2
      %v1100 = vxor.u32 %v1090, 2147483648
      %v1101 = vsel %vm1099, %v1100, %v1091
      %v1102 = vsel %vm1095, %v1098, %v1101
      %v1103 = vsel %vm1092, nan, %v1102
      %v1104 = vand.u32 2147483647, %v442
      %vm1105 = vcmp.le.f32.partialorder %v1104, 0.7853982
      %vm1106 = vcmp.lt.s32.totalorder %v442, 0
      %v1107 = vand.u32 %v442, 2139095040
      %v1108 = vshrl.u32 %v1107, 23
      %v1109 = vsub.s32 %v1108, 127
      %v1110 = vand.u32 2147483647, %v442
      %v1111 = vand.u32 %v1110, 8388607
      %v1112 = vor.u32 %v1111, 8388608
      %v1113 = vsub.s32 0, %v1112
      %v1114 = vadd.s32 %v1109, 1
      %vm1115 = vcmp.gt.s32.totalorder %v1114, 0
      %v1116 = vsel %vm1115, %v1114, 0
      %v1117 = vshrl.u32 %v1116, 5
      %v1118 = vand.u32 %v1116, 31
      %v1119 = vsub.s32 32, %v1118
      %v1120 = vshrl.u32 683565275, %v1119
      %v1121 = vshll.u32 683565275, %v1118
      %v1122 = vshrl.u32 2475754826, %v1119
      %v1123 = vor.u32 %v1121, %v1122
      %v1124 = vshll.u32 2475754826, %v1118
      %v1125 = vshrl.u32 2131351028, %v1119
      %v1126 = vor.u32 %v1124, %v1125
      %v1127 = vshll.u32 2131351028, %v1118
      %v1128 = vshrl.u32 2102212464, %v1119
      %v1129 = vor.u32 %v1127, %v1128
      %v1130 = vshll.u32 2102212464, %v1118
      %v1131 = vshrl.u32 920167782, %v1119
      %v1132 = vor.u32 %v1130, %v1131
      %v1133 = vshll.u32 920167782, %v1118
      %v1134 = vshrl.u32 1326507024, %v1119
      %v1135 = vor.u32 %v1133, %v1134
      %vm1136 = vcmp.lt.s32.totalorder %v1117, 1
      %vm1137 = vcmp.lt.s32.totalorder %v1117, 2
      %vm1138 = vcmp.lt.s32.totalorder %v1117, 3
      %vm1139 = vcmp.lt.s32.totalorder %v1117, 4
      %v1140 = vsel %vm1136, %v1120, %v1123
      %v1141 = vsel %vm1139, %v1129, 2102212464
      %v1142 = vsel %vm1138, %v1126, %v1141
      %v1143 = vsel %vm1137, %v1140, %v1142
      %v1144 = vsel %vm1136, %v1123, %v1126
      %v1145 = vsel %vm1139, %v1132, 920167782
      %v1146 = vsel %vm1138, %v1129, %v1145
      %v1147 = vsel %vm1137, %v1144, %v1146
      %v1148 = vsel %vm1136, %v1126, %v1129
      %v1149 = vsel %vm1139, %v1135, 1326507024
      %v1150 = vsel %vm1138, %v1132, %v1149
      %v1151 = vsel %vm1137, %v1148, %v1150
      %v1152 = vshll.u32 %v1112, 8
      %v1153 = vmul.u32.u64.compose %v1152, %v1151
      %v1154 = vextract.low.u32 %v1153
      %v1155 = vextract.high.u32 %v1153
      %v1156 = vmul.u32.u64.compose %v1152, %v1147
      %v1157 = vextract.low.u32 %v1156
      %v1158 = vextract.high.u32 %v1156
      %v1159 = vmul.u32 %v1152, %v1143
      %v1160 = vadd.s32 %v1155, %v1157
      %vm1161 = vc.u32 %v1155, %v1157
      %v1162 = vadd.s32 %v1158, 1
      %v1163 = vsel %vm1161, %v1162, %v1158
      %v1164 = vadd.s32 %v1159, %v1163
      %v1165 = vadd.s32 %v1164, 536870912
      %v1166 = vshrl.u32 %v1165, 30
      %v1167 = vshll.u32 %v1166, 30
      %v1168 = vsub.s32 %v1164, %v1167
      %vm1169 = vcmp.lt.s32.totalorder %v1168, 0
      %v1170 = vsub.s32 0, %v1168
      %v1171 = vsel %vm1169, %v1170, %v1168
      %v1172 = vclz %v1171
      %v1173 = vsub.s32 %v1172, 2
      %vm1174 = vcmp.gt.s32.totalorder 0, %v1173
      %v1175 = vsel %vm1174, 0, %v1173
      %v1176 = vsub.s32 32, %v1175
      %v1177 = vshll.u32 %v1168, %v1175
      %v1178 = vshrl.u32 %v1160, %v1176
      %v1179 = vor.u32 %v1177, %v1178
      %v1180 = vsub.s32 4294967266, %v1175
      %v1181 = vadd.s32 %v1180, 127
      %v1182 = vshll.u32 %v1181, 23
      %v1183 = vor.u32 4788187, %v1182
      %v1184 = vand.u32 2147483647, %v1183
      %v1186 = vcvt.s32.f32 %v1179
      %v1187 = vmul.f32 %v1186, %v1184
      %v1188 = vxor.u32 %v1187, 2147483648
      %v1189 = vsel %vm1106, %v1188, %v1187
      %v1190 = vsub.s32 4, %v1166
      %v1191 = vsel %vm1106, %v1190, %v1166
      %v1192 = vsel %vm1105, %v442, %v1189
      %v1193 = vsel %vm1105, 0, %v1191
      %v1194 = vcosq.f32.pop %v1192
      %v1195 = vsinq.f32.pop %v1192
      %vm1196 = vweird.f32 %v442
      %v1197 = vadd.s32 %v1193, 3
      %v1198 = vand.u32 %v1197, 3
      %vm1199 = vcmp.lt.s32.totalorder %v1198, 2
      %vm1200 = vcmp.eq.s32.totalorder %v1198, 0
      %v1201 = vxor.u32 %v1195, 2147483648
      %v1202 = vsel %vm1200, %v1194, %v1201
      %vm1203 = vcmp.eq.s32.totalorder %v1198, 2
      %v1204 = vxor.u32 %v1194, 2147483648
      %v1205 = vsel %vm1203, %v1204, %v1195
      %v1206 = vsel %vm1199, %v1202, %v1205
      %v1207 = vsel %vm1196, nan, %v1206
      %v1208 = vand.u32 2147483647, %v445
      %vm1209 = vcmp.le.f32.partialorder %v1208, 0.7853982
      %vm1210 = vcmp.lt.s32.totalorder %v445, 0
      %v1211 = vand.u32 %v445, 2139095040
      %v1212 = vshrl.u32 %v1211, 23
      %v1213 = vsub.s32 %v1212, 127
      %v1214 = vand.u32 2147483647, %v445
      %v1215 = vand.u32 %v1214, 8388607
      %v1216 = vor.u32 %v1215, 8388608
      %v1217 = vsub.s32 0, %v1216
      %v1218 = vadd.s32 %v1213, 1
      %vm1219 = vcmp.gt.s32.totalorder %v1218, 0
      %v1220 = vsel %vm1219, %v1218, 0
      %v1221 = vshrl.u32 %v1220, 5
      %v1222 = vand.u32 %v1220, 31
      %v1223 = vsub.s32 32, %v1222
      %v1224 = vshrl.u32 683565275, %v1223
      %v1225 = vshll.u32 683565275, %v1222
      %v1226 = vshrl.u32 2475754826, %v1223
      %v1227 = vor.u32 %v1225, %v1226
      %v1228 = vshll.u32 2475754826, %v1222
      %v1229 = vshrl.u32 2131351028, %v1223
      %v1230 = vor.u32 %v1228, %v1229
      %v1231 = vshll.u32 2131351028, %v1222
      %v1232 = vshrl.u32 2102212464, %v1223
      %v1233 = vor.u32 %v1231, %v1232
      %v1234 = vshll.u32 2102212464, %v1222
      %v1235 = vshrl.u32 920167782, %v1223
      %v1236 = vor.u32 %v1234, %v1235
      %v1237 = vshll.u32 920167782, %v1222
      %v1238 = vshrl.u32 1326507024, %v1223
      %v1239 = vor.u32 %v1237, %v1238
      %vm1240 = vcmp.lt.s32.totalorder %v1221, 1
      %vm1241 = vcmp.lt.s32.totalorder %v1221, 2
      %vm1242 = vcmp.lt.s32.totalorder %v1221, 3
      %vm1243 = vcmp.lt.s32.totalorder %v1221, 4
      %v1244 = vsel %vm1240, %v1224, %v1227
      %v1245 = vsel %vm1243, %v1233, 2102212464
      %v1246 = vsel %vm1242, %v1230, %v1245
      %v1247 = vsel %vm1241, %v1244, %v1246
      %v1248 = vsel %vm1240, %v1227, %v1230
      %v1249 = vsel %vm1243, %v1236, 920167782
      %v1250 = vsel %vm1242, %v1233, %v1249
      %v1251 = vsel %vm1241, %v1248, %v1250
      %v1252 = vsel %vm1240, %v1230, %v1233
      %v1253 = vsel %vm1243, %v1239, 1326507024
      %v1254 = vsel %vm1242, %v1236, %v1253
      %v1255 = vsel %vm1241, %v1252, %v1254
      %v1256 = vshll.u32 %v1216, 8
      %v1257 = vmul.u32.u64.compose %v1256, %v1255
      %v1258 = vextract.low.u32 %v1257
      %v1259 = vextract.high.u32 %v1257
      %v1260 = vmul.u32.u64.compose %v1256, %v1251
      %v1261 = vextract.low.u32 %v1260
      %v1262 = vextract.high.u32 %v1260
      %v1263 = vmul.u32 %v1256, %v1247
      %v1264 = vadd.s32 %v1259, %v1261
      %vm1265 = vc.u32 %v1259, %v1261
      %v1266 = vadd.s32 %v1262, 1
      %v1267 = vsel %vm1265, %v1266, %v1262
      %v1268 = vadd.s32 %v1263, %v1267
      %v1269 = vadd.s32 %v1268, 536870912
      %v1270 = vshrl.u32 %v1269, 30
      %v1271 = vshll.u32 %v1270, 30
      %v1272 = vsub.s32 %v1268, %v1271
      %vm1273 = vcmp.lt.s32.totalorder %v1272, 0
      %v1274 = vsub.s32 0, %v1272
      %v1275 = vsel %vm1273, %v1274, %v1272
      %v1276 = vclz %v1275
      %v1277 = vsub.s32 %v1276, 2
      %vm1278 = vcmp.gt.s32.totalorder 0, %v1277
      %v1279 = vsel %vm1278, 0, %v1277
      %v1280 = vsub.s32 32, %v1279
      %v1281 = vshll.u32 %v1272, %v1279
      %v1282 = vshrl.u32 %v1264, %v1280
      %v1283 = vor.u32 %v1281, %v1282
      %v1284 = vsub.s32 4294967266, %v1279
      %v1285 = vadd.s32 %v1284, 127
      %v1286 = vshll.u32 %v1285, 23
      %v1287 = vor.u32 4788187, %v1286
      %v1288 = vand.u32 2147483647, %v1287
      %v1290 = vcvt.s32.f32 %v1283
      %v1291 = vmul.f32 %v1290, %v1288
      %v1292 = vxor.u32 %v1291, 2147483648
      %v1293 = vsel %vm1210, %v1292, %v1291
      %v1294 = vsub.s32 4, %v1270
      %v1295 = vsel %vm1210, %v1294, %v1270
      %v1296 = vsel %vm1209, %v445, %v1293
      %v1297 = vsel %vm1209, 0, %v1295
      %v1298 = vcosq.f32.pop %v1296
      %v1299 = vsinq.f32.pop %v1296
      %vm1300 = vweird.f32 %v445
      %v1301 = vadd.s32 %v1297, 3
      %v1302 = vand.u32 %v1301, 3
      %vm1303 = vcmp.lt.s32.totalorder %v1302, 2
      %vm1304 = vcmp.eq.s32.totalorder %v1302, 0
      %v1305 = vxor.u32 %v1299, 2147483648
      %v1306 = vsel %vm1304, %v1298, %v1305
      %vm1307 = vcmp.eq.s32.totalorder %v1302, 2
      %v1308 = vxor.u32 %v1298, 2147483648
      %v1309 = vsel %vm1307, %v1308, %v1299
      %v1310 = vsel %vm1303, %v1306, %v1309
      %v1311 = vsel %vm1300, nan, %v1310
      %v1312 = vand.u32 2147483647, %v450
      %vm1313 = vcmp.le.f32.partialorder %v1312, 0.7853982
      %vm1314 = vcmp.lt.s32.totalorder %v450, 0
      %v1315 = vand.u32 %v450, 2139095040
      %v1316 = vshrl.u32 %v1315, 23
      %v1317 = vsub.s32 %v1316, 127
      %v1318 = vand.u32 2147483647, %v450
      %v1319 = vand.u32 %v1318, 8388607
      %v1320 = vor.u32 %v1319, 8388608
      %v1321 = vsub.s32 0, %v1320
      %v1322 = vadd.s32 %v1317, 1
      %vm1323 = vcmp.gt.s32.totalorder %v1322, 0
      %v1324 = vsel %vm1323, %v1322, 0
      %v1325 = vshrl.u32 %v1324, 5
      %v1326 = vand.u32 %v1324, 31
      %v1327 = vsub.s32 32, %v1326
      %v1328 = vshrl.u32 683565275, %v1327
      %v1329 = vshll.u32 683565275, %v1326
      %v1330 = vshrl.u32 2475754826, %v1327
      %v1331 = vor.u32 %v1329, %v1330
      %v1332 = vshll.u32 2475754826, %v1326
      %v1333 = vshrl.u32 2131351028, %v1327
      %v1334 = vor.u32 %v1332, %v1333
      %v1335 = vshll.u32 2131351028, %v1326
      %v1336 = vshrl.u32 2102212464, %v1327
      %v1337 = vor.u32 %v1335, %v1336
      %v1338 = vshll.u32 2102212464, %v1326
      %v1339 = vshrl.u32 920167782, %v1327
      %v1340 = vor.u32 %v1338, %v1339
      %v1341 = vshll.u32 920167782, %v1326
      %v1342 = vshrl.u32 1326507024, %v1327
      %v1343 = vor.u32 %v1341, %v1342
      %vm1344 = vcmp.lt.s32.totalorder %v1325, 1
      %vm1345 = vcmp.lt.s32.totalorder %v1325, 2
      %vm1346 = vcmp.lt.s32.totalorder %v1325, 3
      %vm1347 = vcmp.lt.s32.totalorder %v1325, 4
      %v1348 = vsel %vm1344, %v1328, %v1331
      %v1349 = vsel %vm1347, %v1337, 2102212464
      %v1350 = vsel %vm1346, %v1334, %v1349
      %v1351 = vsel %vm1345, %v1348, %v1350
      %v1352 = vsel %vm1344, %v1331, %v1334
      %v1353 = vsel %vm1347, %v1340, 920167782
      %v1354 = vsel %vm1346, %v1337, %v1353
      %v1355 = vsel %vm1345, %v1352, %v1354
      %v1356 = vsel %vm1344, %v1334, %v1337
      %v1357 = vsel %vm1347, %v1343, 1326507024
      %v1358 = vsel %vm1346, %v1340, %v1357
      %v1359 = vsel %vm1345, %v1356, %v1358
      %v1360 = vshll.u32 %v1320, 8
      %v1361 = vmul.u32.u64.compose %v1360, %v1359
      %v1362 = vextract.low.u32 %v1361
      %v1363 = vextract.high.u32 %v1361
      %v1364 = vmul.u32.u64.compose %v1360, %v1355
      %v1365 = vextract.low.u32 %v1364
      %v1366 = vextract.high.u32 %v1364
      %v1367 = vmul.u32 %v1360, %v1351
      %v1368 = vadd.s32 %v1363, %v1365
      %vm1369 = vc.u32 %v1363, %v1365
      %v1370 = vadd.s32 %v1366, 1
      %v1371 = vsel %vm1369, %v1370, %v1366
      %v1372 = vadd.s32 %v1367, %v1371
      %v1373 = vadd.s32 %v1372, 536870912
      %v1374 = vshrl.u32 %v1373, 30
      %v1375 = vshll.u32 %v1374, 30
      %v1376 = vsub.s32 %v1372, %v1375
      %vm1377 = vcmp.lt.s32.totalorder %v1376, 0
      %v1378 = vsub.s32 0, %v1376
      %v1379 = vsel %vm1377, %v1378, %v1376
      %v1380 = vclz %v1379
      %v1381 = vsub.s32 %v1380, 2
      %vm1382 = vcmp.gt.s32.totalorder 0, %v1381
      %v1383 = vsel %vm1382, 0, %v1381
      %v1384 = vsub.s32 32, %v1383
      %v1385 = vshll.u32 %v1376, %v1383
      %v1386 = vshrl.u32 %v1368, %v1384
      %v1387 = vor.u32 %v1385, %v1386
      %v1388 = vsub.s32 4294967266, %v1383
      %v1389 = vadd.s32 %v1388, 127
      %v1390 = vshll.u32 %v1389, 23
      %v1391 = vor.u32 4788187, %v1390
      %v1392 = vand.u32 2147483647, %v1391
      %v1394 = vcvt.s32.f32 %v1387
      %v1395 = vmul.f32 %v1394, %v1392
      %v1396 = vxor.u32 %v1395, 2147483648
      %v1397 = vsel %vm1314, %v1396, %v1395
      %v1398 = vsub.s32 4, %v1374
      %v1399 = vsel %vm1314, %v1398, %v1374
      %v1400 = vsel %vm1313, %v450, %v1397
      %v1401 = vsel %vm1313, 0, %v1399
      %v1402 = vcosq.f32.pop %v1400
      %v1403 = vsinq.f32.pop %v1400
      %vm1404 = vweird.f32 %v450
      %v1405 = vadd.s32 %v1401, 3
      %v1406 = vand.u32 %v1405, 3
      %vm1407 = vcmp.lt.s32.totalorder %v1406, 2
      %vm1408 = vcmp.eq.s32.totalorder %v1406, 0
      %v1409 = vxor.u32 %v1403, 2147483648
      %v1410 = vsel %vm1408, %v1402, %v1409
      %vm1411 = vcmp.eq.s32.totalorder %v1406, 2
      %v1412 = vxor.u32 %v1402, 2147483648
      %v1413 = vsel %vm1411, %v1412, %v1403
      %v1414 = vsel %vm1407, %v1410, %v1413
      %v1415 = vsel %vm1404, nan, %v1414
      %v1416 = vand.u32 2147483647, %v453
      %vm1417 = vcmp.le.f32.partialorder %v1416, 0.7853982
      %vm1418 = vcmp.lt.s32.totalorder %v453, 0
      %v1419 = vand.u32 %v453, 2139095040
      %v1420 = vshrl.u32 %v1419, 23
      %v1421 = vsub.s32 %v1420, 127
      %v1422 = vand.u32 2147483647, %v453
      %v1423 = vand.u32 %v1422, 8388607
      %v1424 = vor.u32 %v1423, 8388608
      %v1425 = vsub.s32 0, %v1424
      %v1426 = vadd.s32 %v1421, 1
      %vm1427 = vcmp.gt.s32.totalorder %v1426, 0
      %v1428 = vsel %vm1427, %v1426, 0
      %v1429 = vshrl.u32 %v1428, 5
      %v1430 = vand.u32 %v1428, 31
      %v1431 = vsub.s32 32, %v1430
      %v1432 = vshrl.u32 683565275, %v1431
      %v1433 = vshll.u32 683565275, %v1430
      %v1434 = vshrl.u32 2475754826, %v1431
      %v1435 = vor.u32 %v1433, %v1434
      %v1436 = vshll.u32 2475754826, %v1430
      %v1437 = vshrl.u32 2131351028, %v1431
      %v1438 = vor.u32 %v1436, %v1437
      %v1439 = vshll.u32 2131351028, %v1430
      %v1440 = vshrl.u32 2102212464, %v1431
      %v1441 = vor.u32 %v1439, %v1440
      %v1442 = vshll.u32 2102212464, %v1430
      %v1443 = vshrl.u32 920167782, %v1431
      %v1444 = vor.u32 %v1442, %v1443
      %v1445 = vshll.u32 920167782, %v1430
      %v1446 = vshrl.u32 1326507024, %v1431
      %v1447 = vor.u32 %v1445, %v1446
      %vm1448 = vcmp.lt.s32.totalorder %v1429, 1
      %vm1449 = vcmp.lt.s32.totalorder %v1429, 2
      %vm1450 = vcmp.lt.s32.totalorder %v1429, 3
      %vm1451 = vcmp.lt.s32.totalorder %v1429, 4
      %v1452 = vsel %vm1448, %v1432, %v1435
      %v1453 = vsel %vm1451, %v1441, 2102212464
      %v1454 = vsel %vm1450, %v1438, %v1453
      %v1455 = vsel %vm1449, %v1452, %v1454
      %v1456 = vsel %vm1448, %v1435, %v1438
      %v1457 = vsel %vm1451, %v1444, 920167782
      %v1458 = vsel %vm1450, %v1441, %v1457
      %v1459 = vsel %vm1449, %v1456, %v1458
      %v1460 = vsel %vm1448, %v1438, %v1441
      %v1461 = vsel %vm1451, %v1447, 1326507024
      %v1462 = vsel %vm1450, %v1444, %v1461
      %v1463 = vsel %vm1449, %v1460, %v1462
      %v1464 = vshll.u32 %v1424, 8
      %v1465 = vmul.u32.u64.compose %v1464, %v1463
      %v1466 = vextract.low.u32 %v1465
      %v1467 = vextract.high.u32 %v1465
      %v1468 = vmul.u32.u64.compose %v1464, %v1459
      %v1469 = vextract.low.u32 %v1468
      %v1470 = vextract.high.u32 %v1468
      %v1471 = vmul.u32 %v1464, %v1455
      %v1472 = vadd.s32 %v1467, %v1469
      %vm1473 = vc.u32 %v1467, %v1469
      %v1474 = vadd.s32 %v1470, 1
      %v1475 = vsel %vm1473, %v1474, %v1470
      %v1476 = vadd.s32 %v1471, %v1475
      %v1477 = vadd.s32 %v1476, 536870912
      %v1478 = vshrl.u32 %v1477, 30
      %v1479 = vshll.u32 %v1478, 30
      %v1480 = vsub.s32 %v1476, %v1479
      %vm1481 = vcmp.lt.s32.totalorder %v1480, 0
      %v1482 = vsub.s32 0, %v1480
      %v1483 = vsel %vm1481, %v1482, %v1480
      %v1484 = vclz %v1483
      %v1485 = vsub.s32 %v1484, 2
      %vm1486 = vcmp.gt.s32.totalorder 0, %v1485
      %v1487 = vsel %vm1486, 0, %v1485
      %v1488 = vsub.s32 32, %v1487
      %v1489 = vshll.u32 %v1480, %v1487
      %v1490 = vshrl.u32 %v1472, %v1488
      %v1491 = vor.u32 %v1489, %v1490
      %v1492 = vsub.s32 4294967266, %v1487
      %v1493 = vadd.s32 %v1492, 127
      %v1494 = vshll.u32 %v1493, 23
      %v1495 = vor.u32 4788187, %v1494
      %v1496 = vand.u32 2147483647, %v1495
      %v1498 = vcvt.s32.f32 %v1491
      %v1499 = vmul.f32 %v1498, %v1496
      %v1500 = vxor.u32 %v1499, 2147483648
      %v1501 = vsel %vm1418, %v1500, %v1499
      %v1502 = vsub.s32 4, %v1478
      %v1503 = vsel %vm1418, %v1502, %v1478
      %v1504 = vsel %vm1417, %v453, %v1501
      %v1505 = vsel %vm1417, 0, %v1503
      %v1506 = vcosq.f32.pop %v1504
      %v1507 = vsinq.f32.pop %v1504
      %vm1508 = vweird.f32 %v453
      %v1509 = vadd.s32 %v1505, 3
      %v1510 = vand.u32 %v1509, 3
      %vm1511 = vcmp.lt.s32.totalorder %v1510, 2
      %vm1512 = vcmp.eq.s32.totalorder %v1510, 0
      %v1513 = vxor.u32 %v1507, 2147483648
      %v1514 = vsel %vm1512, %v1506, %v1513
      %vm1515 = vcmp.eq.s32.totalorder %v1510, 2
      %v1516 = vxor.u32 %v1506, 2147483648
      %v1517 = vsel %vm1515, %v1516, %v1507
      %v1518 = vsel %vm1511, %v1514, %v1517
      %v1519 = vsel %vm1508, nan, %v1518
      %v1520 = vand.u32 2147483647, %v458
      %vm1521 = vcmp.le.f32.partialorder %v1520, 0.7853982
      %vm1522 = vcmp.lt.s32.totalorder %v458, 0
      %v1523 = vand.u32 %v458, 2139095040
      %v1524 = vshrl.u32 %v1523, 23
      %v1525 = vsub.s32 %v1524, 127
      %v1526 = vand.u32 2147483647, %v458
      %v1527 = vand.u32 %v1526, 8388607
      %v1528 = vor.u32 %v1527, 8388608
      %v1529 = vsub.s32 0, %v1528
      %v1530 = vadd.s32 %v1525, 1
      %vm1531 = vcmp.gt.s32.totalorder %v1530, 0
      %v1532 = vsel %vm1531, %v1530, 0
      %v1533 = vshrl.u32 %v1532, 5
      %v1534 = vand.u32 %v1532, 31
      %v1535 = vsub.s32 32, %v1534
      %v1536 = vshrl.u32 683565275, %v1535
      %v1537 = vshll.u32 683565275, %v1534
      %v1538 = vshrl.u32 2475754826, %v1535
      %v1539 = vor.u32 %v1537, %v1538
      %v1540 = vshll.u32 2475754826, %v1534
      %v1541 = vshrl.u32 2131351028, %v1535
      %v1542 = vor.u32 %v1540, %v1541
      %v1543 = vshll.u32 2131351028, %v1534
      %v1544 = vshrl.u32 2102212464, %v1535
      %v1545 = vor.u32 %v1543, %v1544
      %v1546 = vshll.u32 2102212464, %v1534
      %v1547 = vshrl.u32 920167782, %v1535
      %v1548 = vor.u32 %v1546, %v1547
      %v1549 = vshll.u32 920167782, %v1534
      %v1550 = vshrl.u32 1326507024, %v1535
      %v1551 = vor.u32 %v1549, %v1550
      %vm1552 = vcmp.lt.s32.totalorder %v1533, 1
      %vm1553 = vcmp.lt.s32.totalorder %v1533, 2
      %vm1554 = vcmp.lt.s32.totalorder %v1533, 3
      %vm1555 = vcmp.lt.s32.totalorder %v1533, 4
      %v1556 = vsel %vm1552, %v1536, %v1539
      %v1557 = vsel %vm1555, %v1545, 2102212464
      %v1558 = vsel %vm1554, %v1542, %v1557
      %v1559 = vsel %vm1553, %v1556, %v1558
      %v1560 = vsel %vm1552, %v1539, %v1542
      %v1561 = vsel %vm1555, %v1548, 920167782
      %v1562 = vsel %vm1554, %v1545, %v1561
      %v1563 = vsel %vm1553, %v1560, %v1562
      %v1564 = vsel %vm1552, %v1542, %v1545
      %v1565 = vsel %vm1555, %v1551, 1326507024
      %v1566 = vsel %vm1554, %v1548, %v1565
      %v1567 = vsel %vm1553, %v1564, %v1566
      %v1568 = vshll.u32 %v1528, 8
      %v1569 = vmul.u32.u64.compose %v1568, %v1567
      %v1570 = vextract.low.u32 %v1569
      %v1571 = vextract.high.u32 %v1569
      %v1572 = vmul.u32.u64.compose %v1568, %v1563
      %v1573 = vextract.low.u32 %v1572
      %v1574 = vextract.high.u32 %v1572
      %v1575 = vmul.u32 %v1568, %v1559
      %v1576 = vadd.s32 %v1571, %v1573
      %vm1577 = vc.u32 %v1571, %v1573
      %v1578 = vadd.s32 %v1574, 1
      %v1579 = vsel %vm1577, %v1578, %v1574
      %v1580 = vadd.s32 %v1575, %v1579
      %v1581 = vadd.s32 %v1580, 536870912
      %v1582 = vshrl.u32 %v1581, 30
      %v1583 = vshll.u32 %v1582, 30
      %v1584 = vsub.s32 %v1580, %v1583
      %vm1585 = vcmp.lt.s32.totalorder %v1584, 0
      %v1586 = vsub.s32 0, %v1584
      %v1587 = vsel %vm1585, %v1586, %v1584
      %v1588 = vclz %v1587
      %v1589 = vsub.s32 %v1588, 2
      %vm1590 = vcmp.gt.s32.totalorder 0, %v1589
      %v1591 = vsel %vm1590, 0, %v1589
      %v1592 = vsub.s32 32, %v1591
      %v1593 = vshll.u32 %v1584, %v1591
      %v1594 = vshrl.u32 %v1576, %v1592
      %v1595 = vor.u32 %v1593, %v1594
      %v1596 = vsub.s32 4294967266, %v1591
      %v1597 = vadd.s32 %v1596, 127
      %v1598 = vshll.u32 %v1597, 23
      %v1599 = vor.u32 4788187, %v1598
      %v1600 = vand.u32 2147483647, %v1599
      %v1602 = vcvt.s32.f32 %v1595
      %v1603 = vmul.f32 %v1602, %v1600
      %v1604 = vxor.u32 %v1603, 2147483648
      %v1605 = vsel %vm1522, %v1604, %v1603
      %v1606 = vsub.s32 4, %v1582
      %v1607 = vsel %vm1522, %v1606, %v1582
      %v1608 = vsel %vm1521, %v458, %v1605
      %v1609 = vsel %vm1521, 0, %v1607
      %v1610 = vcosq.f32.pop %v1608
      %v1611 = vsinq.f32.pop %v1608
      %vm1612 = vweird.f32 %v458
      %v1613 = vadd.s32 %v1609, 3
      %v1614 = vand.u32 %v1613, 3
      %vm1615 = vcmp.lt.s32.totalorder %v1614, 2
      %vm1616 = vcmp.eq.s32.totalorder %v1614, 0
      %v1617 = vxor.u32 %v1611, 2147483648
      %v1618 = vsel %vm1616, %v1610, %v1617
      %vm1619 = vcmp.eq.s32.totalorder %v1614, 2
      %v1620 = vxor.u32 %v1610, 2147483648
      %v1621 = vsel %vm1619, %v1620, %v1611
      %v1622 = vsel %vm1615, %v1618, %v1621
      %v1623 = vsel %vm1612, nan, %v1622
      %v1624 = vand.u32 2147483647, %v461
      %vm1625 = vcmp.le.f32.partialorder %v1624, 0.7853982
      %vm1626 = vcmp.lt.s32.totalorder %v461, 0
      %v1627 = vand.u32 %v461, 2139095040
      %v1628 = vshrl.u32 %v1627, 23
      %v1629 = vsub.s32 %v1628, 127
      %v1630 = vand.u32 2147483647, %v461
      %v1631 = vand.u32 %v1630, 8388607
      %v1632 = vor.u32 %v1631, 8388608
      %v1633 = vsub.s32 0, %v1632
      %v1634 = vadd.s32 %v1629, 1
      %vm1635 = vcmp.gt.s32.totalorder %v1634, 0
      %v1636 = vsel %vm1635, %v1634, 0
      %v1637 = vshrl.u32 %v1636, 5
      %v1638 = vand.u32 %v1636, 31
      %v1639 = vsub.s32 32, %v1638
      %v1640 = vshrl.u32 683565275, %v1639
      %v1641 = vshll.u32 683565275, %v1638
      %v1642 = vshrl.u32 2475754826, %v1639
      %v1643 = vor.u32 %v1641, %v1642
      %v1644 = vshll.u32 2475754826, %v1638
      %v1645 = vshrl.u32 2131351028, %v1639
      %v1646 = vor.u32 %v1644, %v1645
      %v1647 = vshll.u32 2131351028, %v1638
      %v1648 = vshrl.u32 2102212464, %v1639
      %v1649 = vor.u32 %v1647, %v1648
      %v1650 = vshll.u32 2102212464, %v1638
      %v1651 = vshrl.u32 920167782, %v1639
      %v1652 = vor.u32 %v1650, %v1651
      %v1653 = vshll.u32 920167782, %v1638
      %v1654 = vshrl.u32 1326507024, %v1639
      %v1655 = vor.u32 %v1653, %v1654
      %vm1656 = vcmp.lt.s32.totalorder %v1637, 1
      %vm1657 = vcmp.lt.s32.totalorder %v1637, 2
      %vm1658 = vcmp.lt.s32.totalorder %v1637, 3
      %vm1659 = vcmp.lt.s32.totalorder %v1637, 4
      %v1660 = vsel %vm1656, %v1640, %v1643
      %v1661 = vsel %vm1659, %v1649, 2102212464
      %v1662 = vsel %vm1658, %v1646, %v1661
      %v1663 = vsel %vm1657, %v1660, %v1662
      %v1664 = vsel %vm1656, %v1643, %v1646
      %v1665 = vsel %vm1659, %v1652, 920167782
      %v1666 = vsel %vm1658, %v1649, %v1665
      %v1667 = vsel %vm1657, %v1664, %v1666
      %v1668 = vsel %vm1656, %v1646, %v1649
      %v1669 = vsel %vm1659, %v1655, 1326507024
      %v1670 = vsel %vm1658, %v1652, %v1669
      %v1671 = vsel %vm1657, %v1668, %v1670
      %v1672 = vshll.u32 %v1632, 8
      %v1673 = vmul.u32.u64.compose %v1672, %v1671
      %v1674 = vextract.low.u32 %v1673
      %v1675 = vextract.high.u32 %v1673
      %v1676 = vmul.u32.u64.compose %v1672, %v1667
      %v1677 = vextract.low.u32 %v1676
      %v1678 = vextract.high.u32 %v1676
      %v1679 = vmul.u32 %v1672, %v1663
      %v1680 = vadd.s32 %v1675, %v1677
      %vm1681 = vc.u32 %v1675, %v1677
      %v1682 = vadd.s32 %v1678, 1
      %v1683 = vsel %vm1681, %v1682, %v1678
      %v1684 = vadd.s32 %v1679, %v1683
      %v1685 = vadd.s32 %v1684, 536870912
      %v1686 = vshrl.u32 %v1685, 30
      %v1687 = vshll.u32 %v1686, 30
      %v1688 = vsub.s32 %v1684, %v1687
      %vm1689 = vcmp.lt.s32.totalorder %v1688, 0
      %v1690 = vsub.s32 0, %v1688
      %v1691 = vsel %vm1689, %v1690, %v1688
      %v1692 = vclz %v1691
      %v1693 = vsub.s32 %v1692, 2
      %vm1694 = vcmp.gt.s32.totalorder 0, %v1693
      %v1695 = vsel %vm1694, 0, %v1693
      %v1696 = vsub.s32 32, %v1695
      %v1697 = vshll.u32 %v1688, %v1695
      %v1698 = vshrl.u32 %v1680, %v1696
      %v1699 = vor.u32 %v1697, %v1698
      %v1700 = vsub.s32 4294967266, %v1695
      %v1701 = vadd.s32 %v1700, 127
      %v1702 = vshll.u32 %v1701, 23
      %v1703 = vor.u32 4788187, %v1702
      %v1704 = vand.u32 2147483647, %v1703
      %v1706 = vcvt.s32.f32 %v1699
      %v1707 = vmul.f32 %v1706, %v1704
      %v1708 = vxor.u32 %v1707, 2147483648
      %v1709 = vsel %vm1626, %v1708, %v1707
      %v1710 = vsub.s32 4, %v1686
      %v1711 = vsel %vm1626, %v1710, %v1686
      %v1712 = vsel %vm1625, %v461, %v1709
      %v1713 = vsel %vm1625, 0, %v1711
      %v1714 = vcosq.f32.pop %v1712
      %v1715 = vsinq.f32.pop %v1712
      %vm1716 = vweird.f32 %v461
      %v1717 = vadd.s32 %v1713, 3
      %v1718 = vand.u32 %v1717, 3
      %vm1719 = vcmp.lt.s32.totalorder %v1718, 2
      %vm1720 = vcmp.eq.s32.totalorder %v1718, 0
      %v1721 = vxor.u32 %v1715, 2147483648
      %v1722 = vsel %vm1720, %v1714, %v1721
      %vm1723 = vcmp.eq.s32.totalorder %v1718, 2
      %v1724 = vxor.u32 %v1714, 2147483648
      %v1725 = vsel %vm1723, %v1724, %v1715
      %v1726 = vsel %vm1719, %v1722, %v1725
      %v1727 = vsel %vm1716, nan, %v1726
      %v1728 = vand.u32 2147483647, %v466
      %vm1729 = vcmp.le.f32.partialorder %v1728, 0.7853982
      %vm1730 = vcmp.lt.s32.totalorder %v466, 0
      %v1731 = vand.u32 %v466, 2139095040
      %v1732 = vshrl.u32 %v1731, 23
      %v1733 = vsub.s32 %v1732, 127
      %v1734 = vand.u32 2147483647, %v466
      %v1735 = vand.u32 %v1734, 8388607
      %v1736 = vor.u32 %v1735, 8388608
      %v1737 = vsub.s32 0, %v1736
      %v1738 = vadd.s32 %v1733, 1
      %vm1739 = vcmp.gt.s32.totalorder %v1738, 0
      %v1740 = vsel %vm1739, %v1738, 0
      %v1741 = vshrl.u32 %v1740, 5
      %v1742 = vand.u32 %v1740, 31
      %v1743 = vsub.s32 32, %v1742
      %v1744 = vshrl.u32 683565275, %v1743
      %v1745 = vshll.u32 683565275, %v1742
      %v1746 = vshrl.u32 2475754826, %v1743
      %v1747 = vor.u32 %v1745, %v1746
      %v1748 = vshll.u32 2475754826, %v1742
      %v1749 = vshrl.u32 2131351028, %v1743
      %v1750 = vor.u32 %v1748, %v1749
      %v1751 = vshll.u32 2131351028, %v1742
      %v1752 = vshrl.u32 2102212464, %v1743
      %v1753 = vor.u32 %v1751, %v1752
      %v1754 = vshll.u32 2102212464, %v1742
      %v1755 = vshrl.u32 920167782, %v1743
      %v1756 = vor.u32 %v1754, %v1755
      %v1757 = vshll.u32 920167782, %v1742
      %v1758 = vshrl.u32 1326507024, %v1743
      %v1759 = vor.u32 %v1757, %v1758
      %vm1760 = vcmp.lt.s32.totalorder %v1741, 1
      %vm1761 = vcmp.lt.s32.totalorder %v1741, 2
      %vm1762 = vcmp.lt.s32.totalorder %v1741, 3
      %vm1763 = vcmp.lt.s32.totalorder %v1741, 4
      %v1764 = vsel %vm1760, %v1744, %v1747
      %v1765 = vsel %vm1763, %v1753, 2102212464
      %v1766 = vsel %vm1762, %v1750, %v1765
      %v1767 = vsel %vm1761, %v1764, %v1766
      %v1768 = vsel %vm1760, %v1747, %v1750
      %v1769 = vsel %vm1763, %v1756, 920167782
      %v1770 = vsel %vm1762, %v1753, %v1769
      %v1771 = vsel %vm1761, %v1768, %v1770
      %v1772 = vsel %vm1760, %v1750, %v1753
      %v1773 = vsel %vm1763, %v1759, 1326507024
      %v1774 = vsel %vm1762, %v1756, %v1773
      %v1775 = vsel %vm1761, %v1772, %v1774
      %v1776 = vshll.u32 %v1736, 8
      %v1777 = vmul.u32.u64.compose %v1776, %v1775
      %v1778 = vextract.low.u32 %v1777
      %v1779 = vextract.high.u32 %v1777
      %v1780 = vmul.u32.u64.compose %v1776, %v1771
      %v1781 = vextract.low.u32 %v1780
      %v1782 = vextract.high.u32 %v1780
      %v1783 = vmul.u32 %v1776, %v1767
      %v1784 = vadd.s32 %v1779, %v1781
      %vm1785 = vc.u32 %v1779, %v1781
      %v1786 = vadd.s32 %v1782, 1
      %v1787 = vsel %vm1785, %v1786, %v1782
      %v1788 = vadd.s32 %v1783, %v1787
      %v1789 = vadd.s32 %v1788, 536870912
      %v1790 = vshrl.u32 %v1789, 30
      %v1791 = vshll.u32 %v1790, 30
      %v1792 = vsub.s32 %v1788, %v1791
      %vm1793 = vcmp.lt.s32.totalorder %v1792, 0
      %v1794 = vsub.s32 0, %v1792
      %v1795 = vsel %vm1793, %v1794, %v1792
      %v1796 = vclz %v1795
      %v1797 = vsub.s32 %v1796, 2
      %vm1798 = vcmp.gt.s32.totalorder 0, %v1797
      %v1799 = vsel %vm1798, 0, %v1797
      %v1800 = vsub.s32 32, %v1799
      %v1801 = vshll.u32 %v1792, %v1799
      %v1802 = vshrl.u32 %v1784, %v1800
      %v1803 = vor.u32 %v1801, %v1802
      %v1804 = vsub.s32 4294967266, %v1799
      %v1805 = vadd.s32 %v1804, 127
      %v1806 = vshll.u32 %v1805, 23
      %v1807 = vor.u32 4788187, %v1806
      %v1808 = vand.u32 2147483647, %v1807
      %v1810 = vcvt.s32.f32 %v1803
      %v1811 = vmul.f32 %v1810, %v1808
      %v1812 = vxor.u32 %v1811, 2147483648
      %v1813 = vsel %vm1730, %v1812, %v1811
      %v1814 = vsub.s32 4, %v1790
      %v1815 = vsel %vm1730, %v1814, %v1790
      %v1816 = vsel %vm1729, %v466, %v1813
      %v1817 = vsel %vm1729, 0, %v1815
      %v1818 = vcosq.f32.pop %v1816
      %v1819 = vsinq.f32.pop %v1816
      %vm1820 = vweird.f32 %v466
      %v1821 = vadd.s32 %v1817, 3
      %v1822 = vand.u32 %v1821, 3
      %vm1823 = vcmp.lt.s32.totalorder %v1822, 2
      %vm1824 = vcmp.eq.s32.totalorder %v1822, 0
      %v1825 = vxor.u32 %v1819, 2147483648
      %v1826 = vsel %vm1824, %v1818, %v1825
      %vm1827 = vcmp.eq.s32.totalorder %v1822, 2
      %v1828 = vxor.u32 %v1818, 2147483648
      %v1829 = vsel %vm1827, %v1828, %v1819
      %v1830 = vsel %vm1823, %v1826, %v1829
      %v1831 = vsel %vm1820, nan, %v1830
      %v1832 = vand.u32 2147483647, %v469
      %vm1833 = vcmp.le.f32.partialorder %v1832, 0.7853982
      %vm1834 = vcmp.lt.s32.totalorder %v469, 0
      %v1835 = vand.u32 %v469, 2139095040
      %v1836 = vshrl.u32 %v1835, 23
      %v1837 = vsub.s32 %v1836, 127
      %v1838 = vand.u32 2147483647, %v469
      %v1839 = vand.u32 %v1838, 8388607
      %v1840 = vor.u32 %v1839, 8388608
      %v1841 = vsub.s32 0, %v1840
      %v1842 = vadd.s32 %v1837, 1
      %vm1843 = vcmp.gt.s32.totalorder %v1842, 0
      %v1844 = vsel %vm1843, %v1842, 0
      %v1845 = vshrl.u32 %v1844, 5
      %v1846 = vand.u32 %v1844, 31
      %v1847 = vsub.s32 32, %v1846
      %v1848 = vshrl.u32 683565275, %v1847
      %v1849 = vshll.u32 683565275, %v1846
      %v1850 = vshrl.u32 2475754826, %v1847
      %v1851 = vor.u32 %v1849, %v1850
      %v1852 = vshll.u32 2475754826, %v1846
      %v1853 = vshrl.u32 2131351028, %v1847
      %v1854 = vor.u32 %v1852, %v1853
      %v1855 = vshll.u32 2131351028, %v1846
      %v1856 = vshrl.u32 2102212464, %v1847
      %v1857 = vor.u32 %v1855, %v1856
      %v1858 = vshll.u32 2102212464, %v1846
      %v1859 = vshrl.u32 920167782, %v1847
      %v1860 = vor.u32 %v1858, %v1859
      %v1861 = vshll.u32 920167782, %v1846
      %v1862 = vshrl.u32 1326507024, %v1847
      %v1863 = vor.u32 %v1861, %v1862
      %vm1864 = vcmp.lt.s32.totalorder %v1845, 1
      %vm1865 = vcmp.lt.s32.totalorder %v1845, 2
      %vm1866 = vcmp.lt.s32.totalorder %v1845, 3
      %vm1867 = vcmp.lt.s32.totalorder %v1845, 4
      %v1868 = vsel %vm1864, %v1848, %v1851
      %v1869 = vsel %vm1867, %v1857, 2102212464
      %v1870 = vsel %vm1866, %v1854, %v1869
      %v1871 = vsel %vm1865, %v1868, %v1870
      %v1872 = vsel %vm1864, %v1851, %v1854
      %v1873 = vsel %vm1867, %v1860, 920167782
      %v1874 = vsel %vm1866, %v1857, %v1873
      %v1875 = vsel %vm1865, %v1872, %v1874
      %v1876 = vsel %vm1864, %v1854, %v1857
      %v1877 = vsel %vm1867, %v1863, 1326507024
      %v1878 = vsel %vm1866, %v1860, %v1877
      %v1879 = vsel %vm1865, %v1876, %v1878
      %v1880 = vshll.u32 %v1840, 8
      %v1881 = vmul.u32.u64.compose %v1880, %v1879
      %v1882 = vextract.low.u32 %v1881
      %v1883 = vextract.high.u32 %v1881
      %v1884 = vmul.u32.u64.compose %v1880, %v1875
      %v1885 = vextract.low.u32 %v1884
      %v1886 = vextract.high.u32 %v1884
      %v1887 = vmul.u32 %v1880, %v1871
      %v1888 = vadd.s32 %v1883, %v1885
      %vm1889 = vc.u32 %v1883, %v1885
      %v1890 = vadd.s32 %v1886, 1
      %v1891 = vsel %vm1889, %v1890, %v1886
      %v1892 = vadd.s32 %v1887, %v1891
      %v1893 = vadd.s32 %v1892, 536870912
      %v1894 = vshrl.u32 %v1893, 30
      %v1895 = vshll.u32 %v1894, 30
      %v1896 = vsub.s32 %v1892, %v1895
      %vm1897 = vcmp.lt.s32.totalorder %v1896, 0
      %v1898 = vsub.s32 0, %v1896
      %v1899 = vsel %vm1897, %v1898, %v1896
      %v1900 = vclz %v1899
      %v1901 = vsub.s32 %v1900, 2
      %vm1902 = vcmp.gt.s32.totalorder 0, %v1901
      %v1903 = vsel %vm1902, 0, %v1901
      %v1904 = vsub.s32 32, %v1903
      %v1905 = vshll.u32 %v1896, %v1903
      %v1906 = vshrl.u32 %v1888, %v1904
      %v1907 = vor.u32 %v1905, %v1906
      %v1908 = vsub.s32 4294967266, %v1903
      %v1909 = vadd.s32 %v1908, 127
      %v1910 = vshll.u32 %v1909, 23
      %v1911 = vor.u32 4788187, %v1910
      %v1912 = vand.u32 2147483647, %v1911
      %v1914 = vcvt.s32.f32 %v1907
      %v1915 = vmul.f32 %v1914, %v1912
      %v1916 = vxor.u32 %v1915, 2147483648
      %v1917 = vsel %vm1834, %v1916, %v1915
      %v1918 = vsub.s32 4, %v1894
      %v1919 = vsel %vm1834, %v1918, %v1894
      %v1920 = vsel %vm1833, %v469, %v1917
      %v1921 = vsel %vm1833, 0, %v1919
      %v1922 = vcosq.f32.pop %v1920
      %v1923 = vsinq.f32.pop %v1920
      %vm1924 = vweird.f32 %v469
      %v1925 = vadd.s32 %v1921, 3
      %v1926 = vand.u32 %v1925, 3
      %vm1927 = vcmp.lt.s32.totalorder %v1926, 2
      %vm1928 = vcmp.eq.s32.totalorder %v1926, 0
      %v1929 = vxor.u32 %v1923, 2147483648
      %v1930 = vsel %vm1928, %v1922, %v1929
      %vm1931 = vcmp.eq.s32.totalorder %v1926, 2
      %v1932 = vxor.u32 %v1922, 2147483648
      %v1933 = vsel %vm1931, %v1932, %v1923
      %v1934 = vsel %vm1927, %v1930, %v1933
      %v1935 = vsel %vm1924, nan, %v1934
      %v1936 = vand.u32 2147483647, %v474
      %vm1937 = vcmp.le.f32.partialorder %v1936, 0.7853982
      %vm1938 = vcmp.lt.s32.totalorder %v474, 0
      %v1939 = vand.u32 %v474, 2139095040
      %v1940 = vshrl.u32 %v1939, 23
      %v1941 = vsub.s32 %v1940, 127
      %v1942 = vand.u32 2147483647, %v474
      %v1943 = vand.u32 %v1942, 8388607
      %v1944 = vor.u32 %v1943, 8388608
      %v1945 = vsub.s32 0, %v1944
      %v1946 = vadd.s32 %v1941, 1
      %vm1947 = vcmp.gt.s32.totalorder %v1946, 0
      %v1948 = vsel %vm1947, %v1946, 0
      %v1949 = vshrl.u32 %v1948, 5
      %v1950 = vand.u32 %v1948, 31
      %v1951 = vsub.s32 32, %v1950
      %v1952 = vshrl.u32 683565275, %v1951
      %v1953 = vshll.u32 683565275, %v1950
      %v1954 = vshrl.u32 2475754826, %v1951
      %v1955 = vor.u32 %v1953, %v1954
      %v1956 = vshll.u32 2475754826, %v1950
      %v1957 = vshrl.u32 2131351028, %v1951
      %v1958 = vor.u32 %v1956, %v1957
      %v1959 = vshll.u32 2131351028, %v1950
      %v1960 = vshrl.u32 2102212464, %v1951
      %v1961 = vor.u32 %v1959, %v1960
      %v1962 = vshll.u32 2102212464, %v1950
      %v1963 = vshrl.u32 920167782, %v1951
      %v1964 = vor.u32 %v1962, %v1963
      %v1965 = vshll.u32 920167782, %v1950
      %v1966 = vshrl.u32 1326507024, %v1951
      %v1967 = vor.u32 %v1965, %v1966
      %vm1968 = vcmp.lt.s32.totalorder %v1949, 1
      %vm1969 = vcmp.lt.s32.totalorder %v1949, 2
      %vm1970 = vcmp.lt.s32.totalorder %v1949, 3
      %vm1971 = vcmp.lt.s32.totalorder %v1949, 4
      %v1972 = vsel %vm1968, %v1952, %v1955
      %v1973 = vsel %vm1971, %v1961, 2102212464
      %v1974 = vsel %vm1970, %v1958, %v1973
      %v1975 = vsel %vm1969, %v1972, %v1974
      %v1976 = vsel %vm1968, %v1955, %v1958
      %v1977 = vsel %vm1971, %v1964, 920167782
      %v1978 = vsel %vm1970, %v1961, %v1977
      %v1979 = vsel %vm1969, %v1976, %v1978
      %v1980 = vsel %vm1968, %v1958, %v1961
      %v1981 = vsel %vm1971, %v1967, 1326507024
      %v1982 = vsel %vm1970, %v1964, %v1981
      %v1983 = vsel %vm1969, %v1980, %v1982
      %v1984 = vshll.u32 %v1944, 8
      %v1985 = vmul.u32.u64.compose %v1984, %v1983
      %v1986 = vextract.low.u32 %v1985
      %v1987 = vextract.high.u32 %v1985
      %v1988 = vmul.u32.u64.compose %v1984, %v1979
      %v1989 = vextract.low.u32 %v1988
      %v1990 = vextract.high.u32 %v1988
      %v1991 = vmul.u32 %v1984, %v1975
      %v1992 = vadd.s32 %v1987, %v1989
      %vm1993 = vc.u32 %v1987, %v1989
      %v1994 = vadd.s32 %v1990, 1
      %v1995 = vsel %vm1993, %v1994, %v1990
      %v1996 = vadd.s32 %v1991, %v1995
      %v1997 = vadd.s32 %v1996, 536870912
      %v1998 = vshrl.u32 %v1997, 30
      %v1999 = vshll.u32 %v1998, 30
      %v2000 = vsub.s32 %v1996, %v1999
      %vm2001 = vcmp.lt.s32.totalorder %v2000, 0
      %v2002 = vsub.s32 0, %v2000
      %v2003 = vsel %vm2001, %v2002, %v2000
      %v2004 = vclz %v2003
      %v2005 = vsub.s32 %v2004, 2
      %vm2006 = vcmp.gt.s32.totalorder 0, %v2005
      %v2007 = vsel %vm2006, 0, %v2005
      %v2008 = vsub.s32 32, %v2007
      %v2009 = vshll.u32 %v2000, %v2007
      %v2010 = vshrl.u32 %v1992, %v2008
      %v2011 = vor.u32 %v2009, %v2010
      %v2012 = vsub.s32 4294967266, %v2007
      %v2013 = vadd.s32 %v2012, 127
      %v2014 = vshll.u32 %v2013, 23
      %v2015 = vor.u32 4788187, %v2014
      %v2016 = vand.u32 2147483647, %v2015
      %v2018 = vcvt.s32.f32 %v2011
      %v2019 = vmul.f32 %v2018, %v2016
      %v2020 = vxor.u32 %v2019, 2147483648
      %v2021 = vsel %vm1938, %v2020, %v2019
      %v2022 = vsub.s32 4, %v1998
      %v2023 = vsel %vm1938, %v2022, %v1998
      %v2024 = vsel %vm1937, %v474, %v2021
      %v2025 = vsel %vm1937, 0, %v2023
      %v2026 = vcosq.f32.pop %v2024
      %v2027 = vsinq.f32.pop %v2024
      %vm2028 = vweird.f32 %v474
      %v2029 = vadd.s32 %v2025, 3
      %v2030 = vand.u32 %v2029, 3
      %vm2031 = vcmp.lt.s32.totalorder %v2030, 2
      %vm2032 = vcmp.eq.s32.totalorder %v2030, 0
      %v2033 = vxor.u32 %v2027, 2147483648
      %v2034 = vsel %vm2032, %v2026, %v2033
      %vm2035 = vcmp.eq.s32.totalorder %v2030, 2
      %v2036 = vxor.u32 %v2026, 2147483648
      %v2037 = vsel %vm2035, %v2036, %v2027
      %v2038 = vsel %vm2031, %v2034, %v2037
      %v2039 = vsel %vm2028, nan, %v2038
      %v2040 = vand.u32 2147483647, %v477
      %vm2041 = vcmp.le.f32.partialorder %v2040, 0.7853982
      %vm2042 = vcmp.lt.s32.totalorder %v477, 0
      %v2043 = vand.u32 %v477, 2139095040
      %v2044 = vshrl.u32 %v2043, 23
      %v2045 = vsub.s32 %v2044, 127
      %v2046 = vand.u32 2147483647, %v477
      %v2047 = vand.u32 %v2046, 8388607
      %v2048 = vor.u32 %v2047, 8388608
      %v2049 = vsub.s32 0, %v2048
      %v2050 = vadd.s32 %v2045, 1
      %vm2051 = vcmp.gt.s32.totalorder %v2050, 0
      %v2052 = vsel %vm2051, %v2050, 0
      %v2053 = vshrl.u32 %v2052, 5
      %v2054 = vand.u32 %v2052, 31
      %v2055 = vsub.s32 32, %v2054
      %v2056 = vshrl.u32 683565275, %v2055
      %v2057 = vshll.u32 683565275, %v2054
      %v2058 = vshrl.u32 2475754826, %v2055
      %v2059 = vor.u32 %v2057, %v2058
      %v2060 = vshll.u32 2475754826, %v2054
      %v2061 = vshrl.u32 2131351028, %v2055
      %v2062 = vor.u32 %v2060, %v2061
      %v2063 = vshll.u32 2131351028, %v2054
      %v2064 = vshrl.u32 2102212464, %v2055
      %v2065 = vor.u32 %v2063, %v2064
      %v2066 = vshll.u32 2102212464, %v2054
      %v2067 = vshrl.u32 920167782, %v2055
      %v2068 = vor.u32 %v2066, %v2067
      %v2069 = vshll.u32 920167782, %v2054
      %v2070 = vshrl.u32 1326507024, %v2055
      %v2071 = vor.u32 %v2069, %v2070
      %vm2072 = vcmp.lt.s32.totalorder %v2053, 1
      %vm2073 = vcmp.lt.s32.totalorder %v2053, 2
      %vm2074 = vcmp.lt.s32.totalorder %v2053, 3
      %vm2075 = vcmp.lt.s32.totalorder %v2053, 4
      %v2076 = vsel %vm2072, %v2056, %v2059
      %v2077 = vsel %vm2075, %v2065, 2102212464
      %v2078 = vsel %vm2074, %v2062, %v2077
      %v2079 = vsel %vm2073, %v2076, %v2078
      %v2080 = vsel %vm2072, %v2059, %v2062
      %v2081 = vsel %vm2075, %v2068, 920167782
      %v2082 = vsel %vm2074, %v2065, %v2081
      %v2083 = vsel %vm2073, %v2080, %v2082
      %v2084 = vsel %vm2072, %v2062, %v2065
      %v2085 = vsel %vm2075, %v2071, 1326507024
      %v2086 = vsel %vm2074, %v2068, %v2085
      %v2087 = vsel %vm2073, %v2084, %v2086
      %v2088 = vshll.u32 %v2048, 8
      %v2089 = vmul.u32.u64.compose %v2088, %v2087
      %v2090 = vextract.low.u32 %v2089
      %v2091 = vextract.high.u32 %v2089
      %v2092 = vmul.u32.u64.compose %v2088, %v2083
      %v2093 = vextract.low.u32 %v2092
      %v2094 = vextract.high.u32 %v2092
      %v2095 = vmul.u32 %v2088, %v2079
      %v2096 = vadd.s32 %v2091, %v2093
      %vm2097 = vc.u32 %v2091, %v2093
      %v2098 = vadd.s32 %v2094, 1
      %v2099 = vsel %vm2097, %v2098, %v2094
      %v2100 = vadd.s32 %v2095, %v2099
      %v2101 = vadd.s32 %v2100, 536870912
      %v2102 = vshrl.u32 %v2101, 30
      %v2103 = vshll.u32 %v2102, 30
      %v2104 = vsub.s32 %v2100, %v2103
      %vm2105 = vcmp.lt.s32.totalorder %v2104, 0
      %v2106 = vsub.s32 0, %v2104
      %v2107 = vsel %vm2105, %v2106, %v2104
      %v2108 = vclz %v2107
      %v2109 = vsub.s32 %v2108, 2
      %vm2110 = vcmp.gt.s32.totalorder 0, %v2109
      %v2111 = vsel %vm2110, 0, %v2109
      %v2112 = vsub.s32 32, %v2111
      %v2113 = vshll.u32 %v2104, %v2111
      %v2114 = vshrl.u32 %v2096, %v2112
      %v2115 = vor.u32 %v2113, %v2114
      %v2116 = vsub.s32 4294967266, %v2111
      %v2117 = vadd.s32 %v2116, 127
      %v2118 = vshll.u32 %v2117, 23
      %v2119 = vor.u32 4788187, %v2118
      %v2120 = vand.u32 2147483647, %v2119
      %v2122 = vcvt.s32.f32 %v2115
      %v2123 = vmul.f32 %v2122, %v2120
      %v2124 = vxor.u32 %v2123, 2147483648
      %v2125 = vsel %vm2042, %v2124, %v2123
      %v2126 = vsub.s32 4, %v2102
      %v2127 = vsel %vm2042, %v2126, %v2102
      %v2128 = vsel %vm2041, %v477, %v2125
      %v2129 = vsel %vm2041, 0, %v2127
      %v2130 = vcosq.f32.pop %v2128
      %v2131 = vsinq.f32.pop %v2128
      %vm2132 = vweird.f32 %v477
      %v2133 = vadd.s32 %v2129, 3
      %v2134 = vand.u32 %v2133, 3
      %vm2135 = vcmp.lt.s32.totalorder %v2134, 2
      %vm2136 = vcmp.eq.s32.totalorder %v2134, 0
      %v2137 = vxor.u32 %v2131, 2147483648
      %v2138 = vsel %vm2136, %v2130, %v2137
      %vm2139 = vcmp.eq.s32.totalorder %v2134, 2
      %v2140 = vxor.u32 %v2130, 2147483648
      %v2141 = vsel %vm2139, %v2140, %v2131
      %v2142 = vsel %vm2135, %v2138, %v2141
      %v2143 = vsel %vm2132, nan, %v2142
      %v2144 = vld [vmem:[#allocation2] sm:$0xff]
      %v2145 = vadd.f32 %v583, %v687
      %v2146 = vadd.f32 %v2145, %v791
      %v2147 = vadd.f32 %v2146, %v895
      %v2148 = vadd.f32 %v2147, %v999
      %v2149 = vadd.f32 %v2148, %v1103
      %v2150 = vadd.f32 %v2149, %v1207
      %v2151 = vadd.f32 %v2150, %v1311
      %v2152 = vadd.f32 %v2151, %v1415
      %v2153 = vadd.f32 %v2152, %v1519
      %v2154 = vadd.f32 %v2153, %v1623
      %v2155 = vadd.f32 %v2154, %v1727
      %v2156 = vadd.f32 %v2155, %v1831
      %v2157 = vadd.f32 %v2156, %v1935
      %v2158 = vadd.f32 %v2157, %v2039
      %v2159 = vadd.f32 %v2158, %v2143
      %v2160 = vadd.f32 %v2144, %v2159
      %2161 = vst [vmem:[#allocation2] sm:$0xff] %v2160
      %p2162 = scmp.eq.s32.totalorder %s22, 3
      // Predicated region
      $region41: #{encoder_forward.1} parent=35 // pred_check
        %p2163 = pneg %p2162
      $region42: #{encoder_forward.1} parent=35 // pred_check_branch
        %2165 = sbr.rel (%p2163) target = $region44
      $region43: #{encoder_forward.1} parent=35 // pred_region
        %v2166 = vld [vmem:[#allocation2] sm:$0xff]
        %v2167 = vld [vmem:[%s273] sm:$0x1]
        %v2169 = vlaneseq
        %v2170 = vshrl.u32 %v2169, 7
        %v2171 = vsub.s32 0, %v2170
        %v2172 = vrot.slane %v2167, %v2171
        %vm2174 = vcmp.gt.f32.partialorder %v2166, %v2172
        %v2175 = vsel %vm2174, 1.0, -1.0
        %2176 = vst [vmem:[%s280] sm:$0xff] %v2175
      $region44: #{encoder_forward.1} parent=35 // pred_fallthru
        _
      %p2177 = scmp.lt.s32.totalorder %s20, 0
      %s2178 = scalar_select %p2177, %s20, 0
      %p2179 = scmp.lt.s32.totalorder %s21, 0
      %s2180 = scalar_select %p2179, %s21, 0
      %s2181 = sadd.s32 %s2180, %s2178
      %s2182 = smul.addr %s2181, 8
      %s2183 = scalar_lea.vmem %s4, %s2182
      // Predicated region
      $region45: #{encoder_forward.1} parent=35 // pred_check
        %p2184 = pneg %p160
      $region46: #{encoder_forward.1} parent=35 // pred_check_branch
        %2186 = sbr.rel (%p2184) target = $region48
      $region47: #{encoder_forward.1} parent=35 // pred_region
        _
      $region48: #{encoder_forward.1} parent=35 // pred_fallthru
        _
      // Predicated region
      $region49: #{encoder_forward.1} parent=35 // pred_check
        %p2187 = pneg %p160
      $region50: #{encoder_forward.1} parent=35 // pred_check_branch
        %2189 = sbr.rel (%p2187) target = $region52
      $region51: #{encoder_forward.1} parent=35 // pred_region
        %p2190 = scmp.lt.s32.totalorder %s20, 0
        %s2191 = scalar_select %p2190, %s20, 0
        %p2192 = scmp.lt.s32.totalorder %s21, 0
        %s2193 = scalar_select %p2192, %s21, 0
        %s2194 = sadd.s32 %s2193, %s2191
        %s2195 = smul.addr %s2194, 8
        %s2196 = scalar_lea.vmem %s4, %s2195
      $region52: #{encoder_forward.1} parent=35 // pred_fallthru
        _
    $region36: #{encoder_forward.1} parent=5 // pred_fallthru
      _
    %p2197 = scmp.le.s32.totalorder 2, %s10
    // Predicated region
    $region53: #{encoder_forward.1} parent=5 // pred_check
      %p2198 = pneg %p2197
    $region54: #{encoder_forward.1} parent=5 // pred_check_branch
      %2200 = sbr.rel (%p2198) target = $region56
    $region55: #{encoder_forward.1} parent=5 // pred_region
      %s2201 = ssub.s32 %s10, 2
    $region56: #{encoder_forward.1} parent=5 // pred_fallthru
      _
  $region6: #{encoder_forward.1} parent=0 // loop_footer
    %s14 = sadd.s32 1, %s10
  $region7: #{encoder_forward.1} parent=0 // loop_footer_branch
    %9 = sbr.rel target = $region3
  $region8: #{encoder_forward.1} parent=0 // loop_exit
    _

</llo_original>
